<compile_context>
chip_gen: v7x
topology: tpu7x:2x2x1
jax: 0.10.0
libtpu: 0.0.40
codegen_flags: <defaults>
</compile_context>

<pallas_src>
import jax
import jax.numpy as jnp
from jax.experimental import pallas as pl
from jax.experimental.pallas import tpu as pltpu

# ----------------------------- configuration -----------------------------
SEQ_LEN = 16
PRED_LEN = 8
LABEL_LEN = 8       # unused by forward
PAST_LEN = 8        # unused by forward
INPUT_SIZE = 8
HIDDEN_SIZE = 32
KERNEL_SIZE = 3
N_LAYER_SIGN = 2
N_LAYER_OFFSET = 2
BATCH = 2
BN_EPS = 1e-5

# static sanity checks for the folded-batch / shift-matrix construction
assert KERNEL_SIZE % 2 == 1, "odd kernel assumed for 'same' padding"
assert KERNEL_SIZE // 2 < SEQ_LEN, "a tap must never span a whole sequence"
assert HIDDEN_SIZE % 8 == 0 and (BATCH * SEQ_LEN) % 8 == 0, "sublane alignment"

# ---------------------- packed-parameter slab layout -----------------------
D_IN1 = INPUT_SIZE + 1                    # input features + folded-bias ones row
R_FOLD = BATCH * SEQ_LEN                  # batch folded onto the time/lane axis
PAD = (KERNEL_SIZE - 1) // 2
SHIFTS = tuple(s for s in range(-PAD, PAD + 1) if s != 0)


def _align8(n):
    return ((n + 7) // 8) * 8


R_WIN = 0                                                  # (H, D_IN1) input map (+bias col)
R_WSIGN = R_WIN + _align8(HIDDEN_SIZE)                     # Ls*K*H tap weights^T (BN scale folded)
R_WOFF = R_WSIGN + N_LAYER_SIGN * KERNEL_SIZE * HIDDEN_SIZE
R_SHMAT = R_WOFF + N_LAYER_OFFSET * HIDDEN_SIZE            # (K-1) x (R, R) shift/boundary matrices
R_SHCOL = R_SHMAT + len(SHIFTS) * R_FOLD                   # (H, Ls+Lo) per-channel shift columns
R_WLC = R_SHCOL + _align8(HIDDEN_SIZE)                     # (1, H) locally-connected weights
R_WSUBR = R_WLC + 8                                        # (1, H) sub_reduce weights
R_WFIN = R_WSUBR + 8                                       # 2 x (R, B*P) block-diag final maps
R_BFIN = R_WFIN + 2 * R_FOLD                               # (2, B*P) final biases (b_lc/b_subr folded)
N_SLAB_ROWS = _align8(R_BFIN + 2)
SLAB_WIDTH = max(HIDDEN_SIZE, D_IN1, R_FOLD, BATCH * PRED_LEN)


# ------------------------------- kernel ----------------------------------
def socnn_kernel(x_ref, p_ref, out_ref):
    H = HIDDEN_SIZE
    R = R_FOLD
    K = KERNEL_SIZE
    BP = BATCH * PRED_LEN

    x_aug = x_ref[...]                                     # (D_IN1, R); last row = ones

    # input_mapping (bias folded into the augmented weight column)
    w_in = p_ref[R_WIN:R_WIN + H, 0:D_IN1]                 # (H, D_IN1)
    x_in = jnp.dot(w_in, x_aug, preferred_element_type=jnp.float32)          # (H, R)

    # boundary-aware time-shift matrices shared by all sign layers (MXU work;
    # 'same'-padding edges and the folded-batch boundary are baked in -> no
    # rolls, no masks)
    sh_mats = [p_ref[R_SHMAT + i * R:R_SHMAT + (i + 1) * R, 0:R]
               for i in range(len(SHIFTS))]

    # ---- sign branch: fused K-tap Conv1d -> BN(eval, scale folded) -> LeakyReLU ----
    xs = x_in
    for l in range(N_LAYER_SIGN):
        r0 = R_WSIGN + l * K * H
        w_cat = p_ref[r0:r0 + K * H, 0:H]                  # (K*H, H), taps on sublanes
        z = jnp.dot(w_cat, xs, preferred_element_type=jnp.float32)           # (K*H, R)
        acc = z[PAD * H:(PAD + 1) * H, :]                  # center tap (shift 0)
        for i, s in enumerate(SHIFTS):
            k = s + PAD
            acc = acc + jnp.dot(z[k * H:(k + 1) * H, :], sh_mats[i],
                                preferred_element_type=jnp.float32)
        xs = acc + p_ref[R_SHCOL:R_SHCOL + H, l:l + 1]     # conv bias + BN shift (folded)
        xs = jnp.maximum(xs, 0.1 * xs)                     # LeakyReLU(0.1)
    x_sign = xs

    # ---- offset branch: 1x1 Conv1d -> BN(eval, scale folded) -> LeakyReLU ----
    xo = x_in
    for l in range(N_LAYER_OFFSET):
        r0 = R_WOFF + l * H
        w_l = p_ref[r0:r0 + H, 0:H]                        # (H, H)
        xo = jnp.dot(w_l, xo, preferred_element_type=jnp.float32)
        xo = xo + p_ref[R_SHCOL:R_SHCOL + H, N_LAYER_SIGN + l:N_LAYER_SIGN + l + 1]
        xo = jnp.maximum(xo, 0.1 * xo)
    x_offset = xo

    # softmax over channels (sublanes); all channel reductions as MXU dots
    m = jnp.max(x_sign, axis=0, keepdims=True)             # (1, R)
    e = jnp.exp(x_sign - m)                                # (H, R)
    x_off = x_in + x_offset                                # (H, R)

    ones_row = jnp.ones((1, H), jnp.float32)
    w_lc = p_ref[R_WLC:R_WLC + 1, 0:H]                     # (1, H)
    w_subr = p_ref[R_WSUBR:R_WSUBR + 1, 0:H]               # (1, H)

    denom = jnp.dot(ones_row, e, preferred_element_type=jnp.float32)         # (1, R)
    num_lc = jnp.dot(w_lc, x_off * e, preferred_element_type=jnp.float32)    # (1, R)
    x_red = jnp.dot(w_subr, x_off, preferred_element_type=jnp.float32)       # (1, R)
    # significance = e / denom; the 1/denom factors out of the channel sum
    x_lc = num_lc * pl.reciprocal(denom, approx=True)                        # (1, R)

    # final Linear(seq_len -> pred_len) per folded batch element as block-diag matmuls
    w_main_blk = p_ref[R_WFIN:R_WFIN + R, 0:BP]            # (R, B*P)
    w_subf_blk = p_ref[R_WFIN + R:R_WFIN + 2 * R, 0:BP]    # (R, B*P)
    y_row = jnp.dot(x_lc, w_main_blk, preferred_element_type=jnp.float32)    # (1, B*P)
    ysub_row = jnp.dot(x_red, w_subf_blk, preferred_element_type=jnp.float32)

    # single merged store: row 0 = y (flattened over batch), row 1 = y_sub
    out_ref[...] = (jnp.concatenate([y_row, ysub_row], axis=0)
                    + p_ref[R_BFIN:R_BFIN + 2, 0:BP])


# ------------------------------- wrapper ----------------------------------
def socnn_forward(seq_x, seq_xt, past_x, past_xt, dec_input, seq_yt, params_slab):
    # only seq_x participates in the PyTorch forward
    del seq_xt, past_x, past_xt, dec_input, seq_yt
    b, s, d_in = seq_x.shape
    r = b * s
    bp = b * PRED_LEN

    # layout plumbing (XLA side): time-on-lanes + ones row for the folded input bias
    x_t = jnp.transpose(jnp.reshape(seq_x, (r, d_in)))                      # (d_in, r)
    x_aug = jnp.concatenate([x_t, jnp.ones((1, r), x_t.dtype)], axis=0)     # (d_in+1, r)

    flops = 2 * r * (D_IN1 * HIDDEN_SIZE
                     + N_LAYER_SIGN * KERNEL_SIZE * HIDDEN_SIZE * HIDDEN_SIZE
                     + N_LAYER_SIGN * len(SHIFTS) * HIDDEN_SIZE * r
                     + N_LAYER_OFFSET * HIDDEN_SIZE * HIDDEN_SIZE
                     + 3 * HIDDEN_SIZE + 2 * bp)
    bytes_accessed = 4 * (x_aug.size + params_slab.size + 2 * bp)

    out = pl.pallas_call(
        socnn_kernel,
        grid=(1,),   # single step; for large B, grid over row chunks with
                     # dimension_semantics=("parallel",) to use both v7x TCs
        in_specs=[
            pl.BlockSpec(x_aug.shape, lambda i: (0, 0)),
            pl.BlockSpec(params_slab.shape, lambda i: (0, 0)),
        ],
        out_specs=pl.BlockSpec((2, bp), lambda i: (0, 0)),
        out_shape=jax.ShapeDtypeStruct((2, bp), jnp.float32),
        compiler_params=pltpu.CompilerParams(dimension_semantics=("arbitrary",)),
        cost_estimate=pl.CostEstimate(flops=flops,
                                      transcendentals=r * HIDDEN_SIZE,
                                      bytes_accessed=bytes_accessed),
    )(x_aug, params_slab)

    y = jnp.reshape(out[0], (b, PRED_LEN))
    y_sub = jnp.reshape(out[1], (b, PRED_LEN))
    return y, y_sub


# -------------------------- deterministic params ---------------------------
def make_params(key):
    ks = list(jax.random.split(key, 24))
    n = iter(range(len(ks)))
    rnd = lambda shape, scale=0.1: scale * jax.random.normal(ks[next(n)], shape, jnp.float32)

    p = {}
    # input_mapping
    p["w_in"] = rnd((INPUT_SIZE, HIDDEN_SIZE))                     # stored transposed
    p["b_in"] = rnd((1, HIDDEN_SIZE))
    # sign conv stack
    w_sign = rnd((N_LAYER_SIGN, HIDDEN_SIZE, HIDDEN_SIZE, KERNEL_SIZE))   # (L, co, ci, K)
    p["w_sign"] = jnp.transpose(w_sign, (0, 3, 2, 1))              # (L, K, ci, co)
    p["b_sign"] = rnd((N_LAYER_SIGN, 1, HIDDEN_SIZE))
    g = 1.0 + rnd((N_LAYER_SIGN, 1, HIDDEN_SIZE))
    bta = rnd((N_LAYER_SIGN, 1, HIDDEN_SIZE))
    mu = rnd((N_LAYER_SIGN, 1, HIDDEN_SIZE))
    var = 1.0 + 0.5 * jnp.abs(rnd((N_LAYER_SIGN, 1, HIDDEN_SIZE)))
    p["sc_sign"] = g / jnp.sqrt(var + BN_EPS)
    p["sh_sign"] = bta - mu * p["sc_sign"]
    # offset conv stack (kernel_size = 1)
    w_off = rnd((N_LAYER_OFFSET, HIDDEN_SIZE, HIDDEN_SIZE))        # (L, co, ci)
    p["w_off"] = jnp.transpose(w_off, (0, 2, 1))                   # (L, ci, co)
    p["b_off"] = rnd((N_LAYER_OFFSET, 1, HIDDEN_SIZE))
    g = 1.0 + rnd((N_LAYER_OFFSET, 1, HIDDEN_SIZE))
    bta = rnd((N_LAYER_OFFSET, 1, HIDDEN_SIZE))
    mu = rnd((N_LAYER_OFFSET, 1, HIDDEN_SIZE))
    var = 1.0 + 0.5 * jnp.abs(rnd((N_LAYER_OFFSET, 1, HIDDEN_SIZE)))
    p["sc_off"] = g / jnp.sqrt(var + BN_EPS)
    p["sh_off"] = bta - mu * p["sc_off"]
    # sign_locally_connected: Conv1d(H, 1, 1)
    p["w_lc"] = rnd((1, HIDDEN_SIZE))
    p["b_lc"] = rnd((1, 1))
    # main_final_mapping: Linear(S, P)
    p["w_main"] = rnd((SEQ_LEN, PRED_LEN))                          # stored transposed
    p["b_main"] = rnd((1, PRED_LEN))
    # sub_reduce_mapping: Linear(H, 1)
    p["w_subr"] = rnd((1, HIDDEN_SIZE))
    p["b_subr"] = rnd((1, 1))
    # sub_final_mapping: Linear(S, P)
    p["w_subf"] = rnd((SEQ_LEN, PRED_LEN))
    p["b_subf"] = rnd((1, PRED_LEN))
    return p


def pack_params(p):
    """Fold biases / eval-mode BN into the weights and pack everything into one slab."""
    H, K, S, P, B = HIDDEN_SIZE, KERNEL_SIZE, SEQ_LEN, PRED_LEN, BATCH
    Ls, Lo = N_LAYER_SIGN, N_LAYER_OFFSET
    R = R_FOLD

    slab = jnp.zeros((N_SLAB_ROWS, SLAB_WIDTH), jnp.float32)

    # input mapping; bias folded into an extra column (x carries a ones row)
    w_in_aug = jnp.concatenate([p["w_in"].T, p["b_in"].T], axis=1)          # (H, D_in+1)
    slab = slab.at[R_WIN:R_WIN + H, 0:D_IN1].set(w_in_aug)

    # sign conv taps, transposed, BN scale folded into output-channel rows;
    # taps stacked on sublanes so the per-tap slices are vreg-aligned
    for l in range(Ls):
        sc = p["sc_sign"][l]                                                 # (1, H) per co
        for k in range(K):
            blk = (p["w_sign"][l, k] * sc).T                                 # (co, ci)
            r0 = R_WSIGN + (l * K + k) * H
            slab = slab.at[r0:r0 + H, 0:H].set(blk)

    # offset 1x1 convs, transposed, BN scale folded
    for l in range(Lo):
        blk = (p["w_off"][l] * p["sc_off"][l]).T
        r0 = R_WOFF + l * H
        slab = slab.at[r0:r0 + H, 0:H].set(blk)

    # boundary-aware shift matrices: (z @ Sh)[:, t] = z[:, t+shift] iff t+shift
    # lies in the same folded sequence, else 0  -> exactly replaces roll + mask
    cols = jnp.arange(R)
    rows = jnp.arange(R)[:, None]
    for i, shift in enumerate(SHIFTS):
        src = cols + shift
        valid = (src >= 0) & (src < R) & (src // S == cols // S)
        sh_mat = ((rows == src[None, :]) & valid[None, :]).astype(jnp.float32)
        r0 = R_SHMAT + i * R
        slab = slab.at[r0:r0 + R, 0:R].set(sh_mat)

    # per-channel shifts: conv bias + eval-mode BN shift folded into one column
    for l in range(Ls):
        col = (p["sh_sign"][l] + p["sc_sign"][l] * p["b_sign"][l]).T         # (H, 1)
        slab = slab.at[R_SHCOL:R_SHCOL + H, l:l + 1].set(col)
    for l in range(Lo):
        col = (p["sh_off"][l] + p["sc_off"][l] * p["b_off"][l]).T
        slab = slab.at[R_SHCOL:R_SHCOL + H, Ls + l:Ls + l + 1].set(col)

    # channel-reduction rows (their biases are folded into the final biases below)
    slab = slab.at[R_WLC:R_WLC + 1, 0:H].set(p["w_lc"])
    slab = slab.at[R_WSUBR:R_WSUBR + 1, 0:H].set(p["w_subr"])

    # block-diagonal final mappings: one (S, P) block per folded batch element
    for b in range(B):
        slab = slab.at[R_WFIN + b * S:R_WFIN + (b + 1) * S,
                       b * P:(b + 1) * P].set(p["w_main"])
        slab = slab.at[R_WFIN + R + b * S:R_WFIN + R + (b + 1) * S,
                       b * P:(b + 1) * P].set(p["w_subf"])

    # final biases with b_lc / b_subr folded in (exact), tiled per batch element
    b_main_adj = p["b_main"] + p["b_lc"][0, 0] * jnp.sum(p["w_main"], axis=0, keepdims=True)
    b_subf_adj = p["b_subf"] + p["b_subr"][0, 0] * jnp.sum(p["w_subf"], axis=0, keepdims=True)
    slab = slab.at[R_BFIN:R_BFIN + 1, 0:B * P].set(jnp.tile(b_main_adj, (1, B)))
    slab = slab.at[R_BFIN + 1:R_BFIN + 2, 0:B * P].set(jnp.tile(b_subf_adj, (1, B)))
    return slab


# ---------------------------- pure-JAX reference ---------------------------
def reference(seq_x, p):
    b, s, _ = seq_x.shape
    x_in = seq_x @ p["w_in"] + p["b_in"][0]                        # (b, s, h)
    pad = (KERNEL_SIZE - 1) // 2

    xs = x_in
    for l in range(N_LAYER_SIGN):
        acc = jnp.zeros_like(xs) + p["b_sign"][l]
        for k in range(KERNEL_SIZE):
            shift = k - pad
            xk = jnp.roll(xs, -shift, axis=1)
            t = jnp.arange(s)[None, :, None]
            valid = (t + shift >= 0) & (t + shift < s)
            xk = jnp.where(valid, xk, 0.0)
            acc = acc + xk @ p["w_sign"][l, k]
        xs = acc * p["sc_sign"][l] + p["sh_sign"][l]
        xs = jnp.where(xs > 0, xs, 0.1 * xs)
    x_sign = xs

    xo = x_in
    for l in range(N_LAYER_OFFSET):
        xo = xo @ p["w_off"][l] + p["b_off"][l]
        xo = xo * p["sc_off"][l] + p["sh_off"][l]
        xo = jnp.where(xo > 0, xo, 0.1 * xo)
    x_offset = xo

    significance = jax.nn.softmax(x_sign, axis=2)
    x_off = x_in + x_offset
    xw = x_off * significance
    x_lc = jnp.sum(xw * p["w_lc"], axis=2) + p["b_lc"][0, 0]       # (b, s)
    y = x_lc @ p["w_main"] + p["b_main"][0]                        # (b, P)
    x_red = jnp.sum(x_off * p["w_subr"], axis=2) + p["b_subr"][0, 0]
    y_sub = x_red @ p["w_subf"] + p["b_subf"][0]
    return y, y_sub


# --------------------------------- main ------------------------------------
if __name__ == "__main__":
    key = jax.random.PRNGKey(0)
    k_inp, k_par, k_rest = jax.random.split(key, 3)

    seq_x = jax.random.normal(k_inp, (BATCH, SEQ_LEN, INPUT_SIZE), jnp.float32)
    ks = jax.random.split(k_rest, 5)
    seq_xt = jax.random.normal(ks[0], (BATCH, SEQ_LEN, 4), jnp.float32)
    past_x = jax.random.normal(ks[1], (BATCH, PAST_LEN, INPUT_SIZE), jnp.float32)
    past_xt = jax.random.normal(ks[2], (BATCH, PAST_LEN, 4), jnp.float32)
    dec_input = jax.random.normal(ks[3], (BATCH, LABEL_LEN + PRED_LEN, INPUT_SIZE), jnp.float32)
    seq_yt = jax.random.normal(ks[4], (BATCH, LABEL_LEN + PRED_LEN, 4), jnp.float32)

    params = make_params(k_par)
    packed = pack_params(params)

    y, y_sub = socnn_forward(seq_x, seq_xt, past_x, past_xt, dec_input, seq_yt, packed)
    y = jax.block_until_ready(y)
    y_sub = jax.block_until_ready(y_sub)

    y_ref, y_sub_ref = reference(seq_x, params)
    assert y.shape == (BATCH, PRED_LEN) and y_sub.shape == (BATCH, PRED_LEN)
    # tolerance slightly loosened vs strict f32 to cover pl.reciprocal(approx=True)
    assert jnp.allclose(y, y_ref, atol=5e-4, rtol=5e-4)
    assert jnp.allclose(y_sub, y_sub_ref, atol=5e-4, rtol=5e-4)

    print("KERNEL_OK")
</pallas_src>

<mosaic_0001>
module attributes {stable_mosaic.version = 11 : i64} {
  func.func @socnn_kernel(%arg0: i32, %arg1: memref<9x32xf32, #tpu.memory_space<vmem>>, %arg2: memref<472x32xf32, #tpu.memory_space<vmem>>, %arg3: memref<2x16xf32, #tpu.memory_space<vmem>>) attributes {dimension_semantics = [#tpu.dimension_semantics<arbitrary>], iteration_bounds = array<i64: 1>, scalar_prefetch = 0 : i64, scratch_operands = 0 : i64, tpu.core_type = #tpu.core_type<tc>, window_params = [{pipeline_mode = #tpu.pipeline_mode<synchronous>, transform_indices = @transform_0, window_bounds = array<i64: 9, 32>}, {pipeline_mode = #tpu.pipeline_mode<synchronous>, transform_indices = @transform_1, window_bounds = array<i64: 472, 32>}, {pipeline_mode = #tpu.pipeline_mode<synchronous>, transform_indices = @transform_2, window_bounds = array<i64: 2, 16>}]} {
    %c0 = arith.constant 0 : index
    %c0_0 = arith.constant 0 : index
    %0 = vector.load %arg1[%c0, %c0_0] : memref<9x32xf32, #tpu.memory_space<vmem>>, vector<9x32xf32>
    %c0_1 = arith.constant 0 : index
    %c0_2 = arith.constant 0 : index
    %1 = vector.load %arg2[%c0_1, %c0_2] : memref<472x32xf32, #tpu.memory_space<vmem>>, vector<32x9xf32>
    %cst = arith.constant dense<0.000000e+00> : vector<32x32xf32>
    %2 = tpu.matmul %1, %0, %cst {dimension_numbers = #tpu.dot_dimension_numbers<[1], [0], [0], [1], [0, 0, 1, 1], [], []>} : vector<32x9xf32>, vector<9x32xf32>, vector<32x32xf32> -> vector<32x32xf32>
    %c288 = arith.constant 288 : index
    %c0_3 = arith.constant 0 : index
    %3 = vector.load %arg2[%c288, %c0_3] : memref<472x32xf32, #tpu.memory_space<vmem>>, vector<32x32xf32>
    %c320 = arith.constant 320 : index
    %c0_4 = arith.constant 0 : index
    %4 = vector.load %arg2[%c320, %c0_4] : memref<472x32xf32, #tpu.memory_space<vmem>>, vector<32x32xf32>
    %c32 = arith.constant 32 : index
    %c0_5 = arith.constant 0 : index
    %5 = vector.load %arg2[%c32, %c0_5] : memref<472x32xf32, #tpu.memory_space<vmem>>, vector<96x32xf32>
    %cst_6 = arith.constant dense<0.000000e+00> : vector<96x32xf32>
    %6 = tpu.matmul %5, %2, %cst_6 {dimension_numbers = #tpu.dot_dimension_numbers<[1], [0], [0], [1], [0, 0, 1, 1], [], []>} : vector<96x32xf32>, vector<32x32xf32>, vector<96x32xf32> -> vector<96x32xf32>
    %7 = vector.extract_strided_slice %6 {offsets = [32, 0], sizes = [32, 32], strides = [1, 1]} : vector<96x32xf32> to vector<32x32xf32>
    %8 = vector.extract_strided_slice %6 {offsets = [0, 0], sizes = [32, 32], strides = [1, 1]} : vector<96x32xf32> to vector<32x32xf32>
    %cst_7 = arith.constant dense<0.000000e+00> : vector<32x32xf32>
    %9 = tpu.matmul %8, %3, %cst_7 {dimension_numbers = #tpu.dot_dimension_numbers<[1], [0], [0], [1], [0, 0, 1, 1], [], []>} : vector<32x32xf32>, vector<32x32xf32>, vector<32x32xf32> -> vector<32x32xf32>
    %10 = arith.addf %7, %9 : vector<32x32xf32>
    %11 = vector.extract_strided_slice %6 {offsets = [64, 0], sizes = [32, 32], strides = [1, 1]} : vector<96x32xf32> to vector<32x32xf32>
    %cst_8 = arith.constant dense<0.000000e+00> : vector<32x32xf32>
    %12 = tpu.matmul %11, %4, %cst_8 {dimension_numbers = #tpu.dot_dimension_numbers<[1], [0], [0], [1], [0, 0, 1, 1], [], []>} : vector<32x32xf32>, vector<32x32xf32>, vector<32x32xf32> -> vector<32x32xf32>
    %13 = arith.addf %10, %12 : vector<32x32xf32>
    %c352 = arith.constant 352 : index
    %c0_9 = arith.constant 0 : index
    %14 = vector.load %arg2[%c352, %c0_9] : memref<472x32xf32, #tpu.memory_space<vmem>>, vector<32x1xf32>
    %15 = vector.broadcast %14 : vector<32x1xf32> to vector<32x32xf32>
    %16 = arith.addf %13, %15 : vector<32x32xf32>
    %cst_10 = arith.constant 1.000000e-01 : f32
    %17 = vector.broadcast %cst_10 : f32 to vector<32x32xf32>
    %18 = arith.mulf %17, %16 : vector<32x32xf32>
    %19 = arith.maximumf %16, %18 : vector<32x32xf32>
    %c128 = arith.constant 128 : index
    %c0_11 = arith.constant 0 : index
    %20 = vector.load %arg2[%c128, %c0_11] : memref<472x32xf32, #tpu.memory_space<vmem>>, vector<96x32xf32>
    %cst_12 = arith.constant dense<0.000000e+00> : vector<96x32xf32>
    %21 = tpu.matmul %20, %19, %cst_12 {dimension_numbers = #tpu.dot_dimension_numbers<[1], [0], [0], [1], [0, 0, 1, 1], [], []>} : vector<96x32xf32>, vector<32x32xf32>, vector<96x32xf32> -> vector<96x32xf32>
    %22 = vector.extract_strided_slice %21 {offsets = [32, 0], sizes = [32, 32], strides = [1, 1]} : vector<96x32xf32> to vector<32x32xf32>
    %23 = vector.extract_strided_slice %21 {offsets = [0, 0], sizes = [32, 32], strides = [1, 1]} : vector<96x32xf32> to vector<32x32xf32>
    %cst_13 = arith.constant dense<0.000000e+00> : vector<32x32xf32>
    %24 = tpu.matmul %23, %3, %cst_13 {dimension_numbers = #tpu.dot_dimension_numbers<[1], [0], [0], [1], [0, 0, 1, 1], [], []>} : vector<32x32xf32>, vector<32x32xf32>, vector<32x32xf32> -> vector<32x32xf32>
    %25 = arith.addf %22, %24 : vector<32x32xf32>
    %26 = vector.extract_strided_slice %21 {offsets = [64, 0], sizes = [32, 32], strides = [1, 1]} : vector<96x32xf32> to vector<32x32xf32>
    %cst_14 = arith.constant dense<0.000000e+00> : vector<32x32xf32>
    %27 = tpu.matmul %26, %4, %cst_14 {dimension_numbers = #tpu.dot_dimension_numbers<[1], [0], [0], [1], [0, 0, 1, 1], [], []>} : vector<32x32xf32>, vector<32x32xf32>, vector<32x32xf32> -> vector<32x32xf32>
    %28 = arith.addf %25, %27 : vector<32x32xf32>
    %c352_15 = arith.constant 352 : index
    %c1 = arith.constant 1 : index
    %29 = vector.load %arg2[%c352_15, %c1] : memref<472x32xf32, #tpu.memory_space<vmem>>, vector<32x1xf32>
    %30 = vector.broadcast %29 : vector<32x1xf32> to vector<32x32xf32>
    %31 = arith.addf %28, %30 : vector<32x32xf32>
    %cst_16 = arith.constant 1.000000e-01 : f32
    %32 = vector.broadcast %cst_16 : f32 to vector<32x32xf32>
    %33 = arith.mulf %32, %31 : vector<32x32xf32>
    %34 = arith.maximumf %31, %33 : vector<32x32xf32>
    %c224 = arith.constant 224 : index
    %c0_17 = arith.constant 0 : index
    %35 = vector.load %arg2[%c224, %c0_17] : memref<472x32xf32, #tpu.memory_space<vmem>>, vector<32x32xf32>
    %cst_18 = arith.constant dense<0.000000e+00> : vector<32x32xf32>
    %36 = tpu.matmul %35, %2, %cst_18 {dimension_numbers = #tpu.dot_dimension_numbers<[1], [0], [0], [1], [0, 0, 1, 1], [], []>} : vector<32x32xf32>, vector<32x32xf32>, vector<32x32xf32> -> vector<32x32xf32>
    %c352_19 = arith.constant 352 : index
    %c2 = arith.constant 2 : index
    %37 = vector.load %arg2[%c352_19, %c2] : memref<472x32xf32, #tpu.memory_space<vmem>>, vector<32x1xf32>
    %38 = vector.broadcast %37 : vector<32x1xf32> to vector<32x32xf32>
    %39 = arith.addf %36, %38 : vector<32x32xf32>
    %cst_20 = arith.constant 1.000000e-01 : f32
    %40 = vector.broadcast %cst_20 : f32 to vector<32x32xf32>
    %41 = arith.mulf %40, %39 : vector<32x32xf32>
    %42 = arith.maximumf %39, %41 : vector<32x32xf32>
    %c256 = arith.constant 256 : index
    %c0_21 = arith.constant 0 : index
    %43 = vector.load %arg2[%c256, %c0_21] : memref<472x32xf32, #tpu.memory_space<vmem>>, vector<32x32xf32>
    %cst_22 = arith.constant dense<0.000000e+00> : vector<32x32xf32>
    %44 = tpu.matmul %43, %42, %cst_22 {dimension_numbers = #tpu.dot_dimension_numbers<[1], [0], [0], [1], [0, 0, 1, 1], [], []>} : vector<32x32xf32>, vector<32x32xf32>, vector<32x32xf32> -> vector<32x32xf32>
    %c352_23 = arith.constant 352 : index
    %c3 = arith.constant 3 : index
    %45 = vector.load %arg2[%c352_23, %c3] : memref<472x32xf32, #tpu.memory_space<vmem>>, vector<32x1xf32>
    %46 = vector.broadcast %45 : vector<32x1xf32> to vector<32x32xf32>
    %47 = arith.addf %44, %46 : vector<32x32xf32>
    %cst_24 = arith.constant 1.000000e-01 : f32
    %48 = vector.broadcast %cst_24 : f32 to vector<32x32xf32>
    %49 = arith.mulf %48, %47 : vector<32x32xf32>
    %50 = arith.maximumf %47, %49 : vector<32x32xf32>
    %cst_25 = arith.constant dense<0xFF800000> : vector<32xf32>
    %51 = vector.multi_reduction <maximumf>, %34, %cst_25 [0] : vector<32x32xf32> to vector<32xf32>
    %52 = vector.shape_cast %51 : vector<32xf32> to vector<1x32xf32>
    %53 = vector.broadcast %52 : vector<1x32xf32> to vector<32x32xf32>
    %54 = arith.subf %34, %53 : vector<32x32xf32>
    %55 = math.exp %54 : vector<32x32xf32>
    %56 = arith.addf %2, %50 : vector<32x32xf32>
    %cst_26 = arith.constant 1.000000e+00 : f32
    %57 = vector.broadcast %cst_26 : f32 to vector<1x32xf32>
    %c384 = arith.constant 384 : index
    %c0_27 = arith.constant 0 : index
    %58 = vector.load %arg2[%c384, %c0_27] : memref<472x32xf32, #tpu.memory_space<vmem>>, vector<1x32xf32>
    %c392 = arith.constant 392 : index
    %c0_28 = arith.constant 0 : index
    %59 = vector.load %arg2[%c392, %c0_28] : memref<472x32xf32, #tpu.memory_space<vmem>>, vector<1x32xf32>
    %cst_29 = arith.constant dense<0.000000e+00> : vector<1x32xf32>
    %60 = tpu.matmul %57, %55, %cst_29 {dimension_numbers = #tpu.dot_dimension_numbers<[1], [0], [0], [1], [0, 0, 1, 1], [], []>} : vector<1x32xf32>, vector<32x32xf32>, vector<1x32xf32> -> vector<1x32xf32>
    %61 = arith.mulf %56, %55 : vector<32x32xf32>
    %cst_30 = arith.constant dense<0.000000e+00> : vector<1x32xf32>
    %62 = tpu.matmul %58, %61, %cst_30 {dimension_numbers = #tpu.dot_dimension_numbers<[1], [0], [0], [1], [0, 0, 1, 1], [], []>} : vector<1x32xf32>, vector<32x32xf32>, vector<1x32xf32> -> vector<1x32xf32>
    %cst_31 = arith.constant dense<0.000000e+00> : vector<1x32xf32>
    %63 = tpu.matmul %59, %56, %cst_31 {dimension_numbers = #tpu.dot_dimension_numbers<[1], [0], [0], [1], [0, 0, 1, 1], [], []>} : vector<1x32xf32>, vector<32x32xf32>, vector<1x32xf32> -> vector<1x32xf32>
    %64 = tpu.reciprocal %60 {approx = true} : vector<1x32xf32> -> vector<1x32xf32>
    %65 = arith.mulf %62, %64 : vector<1x32xf32>
    %c400 = arith.constant 400 : index
    %c0_32 = arith.constant 0 : index
    %66 = vector.load %arg2[%c400, %c0_32] : memref<472x32xf32, #tpu.memory_space<vmem>>, vector<32x16xf32>
    %c432 = arith.constant 432 : index
    %c0_33 = arith.constant 0 : index
    %67 = vector.load %arg2[%c432, %c0_33] : memref<472x32xf32, #tpu.memory_space<vmem>>, vector<32x16xf32>
    %cst_34 = arith.constant dense<0.000000e+00> : vector<1x16xf32>
    %68 = tpu.matmul %65, %66, %cst_34 {dimension_numbers = #tpu.dot_dimension_numbers<[1], [0], [0], [1], [0, 0, 1, 1], [], []>} : vector<1x32xf32>, vector<32x16xf32>, vector<1x16xf32> -> vector<1x16xf32>
    %cst_35 = arith.constant dense<0.000000e+00> : vector<1x16xf32>
    %69 = tpu.matmul %63, %67, %cst_35 {dimension_numbers = #tpu.dot_dimension_numbers<[1], [0], [0], [1], [0, 0, 1, 1], [], []>} : vector<1x32xf32>, vector<32x16xf32>, vector<1x16xf32> -> vector<1x16xf32>
    %70 = tpu.concatenate %68, %69 in 0 : vector<1x16xf32>, vector<1x16xf32> -> vector<2x16xf32>
    %c464 = arith.constant 464 : index
    %c0_36 = arith.constant 0 : index
    %71 = vector.load %arg2[%c464, %c0_36] : memref<472x32xf32, #tpu.memory_space<vmem>>, vector<2x16xf32>
    %72 = arith.addf %70, %71 : vector<2x16xf32>
    %c0_37 = arith.constant 0 : index
    %c0_38 = arith.constant 0 : index
    %73 = vector.load %arg3[%c0_37, %c0_38] : memref<2x16xf32, #tpu.memory_space<vmem>>, vector<2x16xf32>
    tpu.vector_store %arg3[%c0_37, %c0_38], %72 {strides = array<i32>} : memref<2x16xf32, #tpu.memory_space<vmem>>, vector<2x16xf32>,
    return
  }
  func.func @transform_0(%arg0: i32) -> (i32, i32) {
    %c0_i32 = arith.constant 0 : i32
    %c0_i32_0 = arith.constant 0 : i32
    %c0_i32_1 = arith.constant 0 : i32
    return %c0_i32, %c0_i32_0 : i32, i32
  }
  func.func @transform_1(%arg0: i32) -> (i32, i32) {
    %c0_i32 = arith.constant 0 : i32
    %c0_i32_0 = arith.constant 0 : i32
    %c0_i32_1 = arith.constant 0 : i32
    return %c0_i32, %c0_i32_0 : i32, i32
  }
  func.func @transform_2(%arg0: i32) -> (i32, i32) {
    %c0_i32 = arith.constant 0 : i32
    %c0_i32_0 = arith.constant 0 : i32
    %c0_i32_1 = arith.constant 0 : i32
    return %c0_i32, %c0_i32_0 : i32, i32
  }
}

</mosaic_0001>

<llo_original>
// kernel: tpu_custom_call.1
$region0: #{tpu_custom_call.1}
  #allocation0 [shape = 'u32[]', space=smem, size = 0x4, offset = 0x4, fixed_abs, tag = 'smem constant byte address 0x4 - core index']
  #allocation1 [shape = 'u32[144,128]{1,0:T(1,128)}', space=vmem, size = 0x12000, scoped, tag = 'internal scratch']
  %s0 = inlined_call_operand.vmem [shape: f32[9,32], index: 0, kind: input, shape index: {}]
  %s1 = inlined_call_operand.vmem [shape: f32[472,32], index: 1, kind: input, shape index: {}]
  %s2 = inlined_call_operand.hbm [shape: f32[2,16], index: 2, kind: output, shape index: {}]
  %s3 = sld [smem:[#allocation0]]
  $region18: #{tpu_custom_call.1} parent=0
    _
  %s5 = ssub.s32 1, %s3
  %s6 = scalar_select 0, %s5, %s3
  $region1: #{tpu_custom_call.1} parent=0
    #allocation2 [shape = 'u8[1024]{0}', space=vmem, size = 0x400, scoped, tag = 'output window, operand 0, single buffered']
    #allocation3 [shape = 's32[1]{0}', space=sflag, size = 0x4, scoped, tag = 'scoped memory for tpu_custom_call.1']
    %7 = vsyncpa [#allocation3], 0
    // Predicated region
    $region2: #{tpu_custom_call.1} parent=1 // pred_check
      _
    $region3: #{tpu_custom_call.1} parent=1 // pred_check_branch
      %9 = sbr.rel (0) target = $region5
    $region4: #{tpu_custom_call.1} parent=1 // pred_region
      _
    $region5: #{tpu_custom_call.1} parent=1 // pred_fallthru
      _
    // Predicated region
    $region6: #{tpu_custom_call.1} parent=1 // pred_check
      _
    $region7: #{tpu_custom_call.1} parent=1 // pred_check_branch
      %11 = sbr.rel (0) target = $region9
    $region8: #{tpu_custom_call.1} parent=1 // pred_region
      _
    $region9: #{tpu_custom_call.1} parent=1 // pred_fallthru
      _
    %v12 = vld [vmem:[%s0] sm:$0xff]
    %v13 = vld [vmem:[%s0 + $0x8] sm:$0x1]
    %v14 = vld [vmem:[%s1] sm:$0xff]
    %v15 = vld [vmem:[%s1 + $0x8] sm:$0xff]
    %v16 = vld [vmem:[%s1 + $0x10] sm:$0xff]
    %v17 = vld [vmem:[%s1 + $0x18] sm:$0xff]
    %vm18 = vcmask 72704
    %v20 = vsel %vm18, %v14, 0
    %v23 = vsel %vm18, %v15, 0
    %v26 = vsel %vm18, %v16, 0
    %v29 = vsel %vm18, %v17, 0
    %vm31 = vcmask 1040384
    %v33 = vsel %vm31, %v13, 0
    %35 = vmatprep.subr.mxu0 0.0
    %36 = vmatpush1.msra.mxu0 %v12
    %37 = vmatprep.subr.mxu0 0.0
    %38 = vmatpush1.msra.mxu0 %v33
    %39 = vmatprep.subr.mxu0 0.0
    %40 = vmatpush1.msra.mxu0 0.0
    %41 = vmatprep.subr.mxu0 0.0
    %42 = vmatpush1.msra.mxu0 0.0
    %43 = vmatprep.subr.mxu0 0.0
    %44 = vmatpush1.msra.mxu0 0.0
    %45 = vmatprep.subr.mxu0 0.0
    %46 = vmatpush1.msra.mxu0 0.0
    %47 = vmatprep.subr.mxu0 0.0
    %48 = vmatpush1.msra.mxu0 0.0
    %49 = vmatprep.subr.mxu0 0.0
    %50 = vmatpush1.msra.mxu0 0.0
    %51 = vmatprep.subr.mxu0 0.0
    %52 = vmatpush1.msra.mxu0 0.0
    %53 = vmatprep.subr.mxu0 0.0
    %54 = vmatpush1.msra.mxu0 0.0
    %55 = vmatprep.subr.mxu0 0.0
    %56 = vmatpush1.msra.mxu0 0.0
    %57 = vmatprep.subr.mxu0 0.0
    %58 = vmatpush1.msra.mxu0 0.0
    %59 = vmatprep.subr.mxu0 0.0
    %60 = vmatpush1.msra.mxu0 0.0
    %61 = vmatprep.subr.mxu0 0.0
    %62 = vmatpush1.msra.mxu0 0.0
    %63 = vmatprep.subr.mxu0 0.0
    %64 = vmatpush1.msra.mxu0 0.0
    %65 = vmatprep.subr.mxu0 0.0
    %66 = vmatpush1.msra.mxu0 0.0
    %67 = vmatprep.subr.mxu0 0.0
    %68 = vmatpush1.msra.mxu0 0.0
    %69 = vmatprep.subr.mxu0 0.0
    %70 = vmatpush1.msra.mxu0 0.0
    %71 = vmatprep.subr.mxu0 0.0
    %72 = vmatpush1.msra.mxu0 0.0
    %73 = vmatprep.subr.mxu0 0.0
    %74 = vmatpush1.msra.mxu0 0.0
    %75 = vmatprep.subr.mxu0 0.0
    %76 = vmatpush1.msra.mxu0 0.0
    %77 = vmatprep.subr.mxu0 0.0
    %78 = vmatpush1.msra.mxu0 0.0
    %79 = vmatprep.subr.mxu0 0.0
    %80 = vmatpush1.msra.mxu0 0.0
    %81 = vmatprep.subr.mxu0 0.0
    %82 = vmatpush1.msra.mxu0 0.0
    %83 = vmatprep.subr.mxu0 0.0
    %84 = vmatpush1.msra.mxu0 0.0
    %85 = vmatprep.subr.mxu0 0.0
    %86 = vmatpush1.msra.mxu0 0.0
    %87 = vmatprep.subr.mxu0 0.0
    %88 = vmatpush1.msra.mxu0 0.0
    %89 = vmatprep.subr.mxu0 0.0
    %90 = vmatpush1.msra.mxu0 0.0
    %91 = vmatprep.subr.mxu0 0.0
    %92 = vmatpush1.msra.mxu0 0.0
    %93 = vmatprep.subr.mxu0 0.0
    %94 = vmatpush1.msra.mxu0 0.0
    %95 = vmatprep.subr.mxu0 0.0
    %96 = vmatpush1.msra.mxu0 0.0
    %97 = vmatprep.subr.mxu0 0.0
    %98 = vmatpush1.msra.mxu0 0.0
    %99 = vmatprep.mubr.f32.mxu0 0.0
    %100 = vmatmul.mubr.f32.gmra.mrb[0].mxu0 %v20
    %v101 = vpop.f32.mrb[0].mxu0
    %v102 = vadd.f32 0.0, %v101
    %v103 = vpop.f32.mrb[0].mxu0
    %104 = vmatprep.mubr.f32.mxu0 0.0
    %105 = vmatmul.mubr.f32.gmra.mrb[0].mxu0 %v23
    %v106 = vpop.f32.mrb[0].mxu0
    %v107 = vadd.f32 0.0, %v106
    %v108 = vpop.f32.mrb[0].mxu0
    %109 = vmatprep.mubr.f32.mxu0 0.0
    %110 = vmatmul.mubr.f32.gmra.mrb[0].mxu0 %v26
    %v111 = vpop.f32.mrb[0].mxu0
    %v112 = vadd.f32 0.0, %v111
    %v113 = vpop.f32.mrb[0].mxu0
    %114 = vmatprep.mubr.f32.mxu0 0.0
    %115 = vmatmul.mubr.f32.gmra.mrb[0].mxu0 %v29
    %v116 = vpop.f32.mrb[0].mxu0
    %v117 = vadd.f32 0.0, %v116
    %v118 = vpop.f32.mrb[0].mxu0
    %119 = vdwg.mxu0
    %v120 = vld [vmem:[%s1 + $0x120] sm:$0xff]
    %v121 = vld [vmem:[%s1 + $0x128] sm:$0xff]
    %v122 = vld [vmem:[%s1 + $0x130] sm:$0xff]
    %v123 = vld [vmem:[%s1 + $0x138] sm:$0xff]
    %v124 = vld [vmem:[%s1 + $0x140] sm:$0xff]
    %v125 = vld [vmem:[%s1 + $0x148] sm:$0xff]
    %v126 = vld [vmem:[%s1 + $0x150] sm:$0xff]
    %v127 = vld [vmem:[%s1 + $0x158] sm:$0xff]
    %v128 = vld [vmem:[%s1 + $0x20] sm:$0xff]
    %v129 = vld [vmem:[%s1 + $0x28] sm:$0xff]
    %v130 = vld [vmem:[%s1 + $0x30] sm:$0xff]
    %v131 = vld [vmem:[%s1 + $0x38] sm:$0xff]
    %v132 = vld [vmem:[%s1 + $0x40] sm:$0xff]
    %v133 = vld [vmem:[%s1 + $0x48] sm:$0xff]
    %v134 = vld [vmem:[%s1 + $0x50] sm:$0xff]
    %v135 = vld [vmem:[%s1 + $0x58] sm:$0xff]
    %v136 = vld [vmem:[%s1 + $0x60] sm:$0xff]
    %v137 = vld [vmem:[%s1 + $0x68] sm:$0xff]
    %v138 = vld [vmem:[%s1 + $0x70] sm:$0xff]
    %v139 = vld [vmem:[%s1 + $0x78] sm:$0xff]
    %vm140 = vcmask 261120
    %v142 = vsel %vm140, %v128, 0
    %v145 = vsel %vm140, %v129, 0
    %v148 = vsel %vm140, %v130, 0
    %v151 = vsel %vm140, %v131, 0
    %v154 = vsel %vm140, %v132, 0
    %v157 = vsel %vm140, %v133, 0
    %v160 = vsel %vm140, %v134, 0
    %v163 = vsel %vm140, %v135, 0
    %v166 = vsel %vm140, %v136, 0
    %v169 = vsel %vm140, %v137, 0
    %v172 = vsel %vm140, %v138, 0
    %v175 = vsel %vm140, %v139, 0
    %177 = vmatprep.subr.mxu0 0.0
    %178 = vmatpush1.msra.mxu0 %v102
    %179 = vmatprep.subr.mxu0 0.0
    %180 = vmatpush1.msra.mxu0 %v107
    %181 = vmatprep.subr.mxu0 0.0
    %182 = vmatpush1.msra.mxu0 %v112
    %183 = vmatprep.subr.mxu0 0.0
    %184 = vmatpush1.msra.mxu0 %v117
    %185 = vmatprep.subr.mxu0 0.0
    %186 = vmatpush1.msra.mxu0 0.0
    %187 = vmatprep.subr.mxu0 0.0
    %188 = vmatpush1.msra.mxu0 0.0
    %189 = vmatprep.subr.mxu0 0.0
    %190 = vmatpush1.msra.mxu0 0.0
    %191 = vmatprep.subr.mxu0 0.0
    %192 = vmatpush1.msra.mxu0 0.0
    %193 = vmatprep.subr.mxu0 0.0
    %194 = vmatpush1.msra.mxu0 0.0
    %195 = vmatprep.subr.mxu0 0.0
    %196 = vmatpush1.msra.mxu0 0.0
    %197 = vmatprep.subr.mxu0 0.0
    %198 = vmatpush1.msra.mxu0 0.0
    %199 = vmatprep.subr.mxu0 0.0
    %200 = vmatpush1.msra.mxu0 0.0
    %201 = vmatprep.subr.mxu0 0.0
    %202 = vmatpush1.msra.mxu0 0.0
    %203 = vmatprep.subr.mxu0 0.0
    %204 = vmatpush1.msra.mxu0 0.0
    %205 = vmatprep.subr.mxu0 0.0
    %206 = vmatpush1.msra.mxu0 0.0
    %207 = vmatprep.subr.mxu0 0.0
    %208 = vmatpush1.msra.mxu0 0.0
    %209 = vmatprep.subr.mxu0 0.0
    %210 = vmatpush1.msra.mxu0 0.0
    %211 = vmatprep.subr.mxu0 0.0
    %212 = vmatpush1.msra.mxu0 0.0
    %213 = vmatprep.subr.mxu0 0.0
    %214 = vmatpush1.msra.mxu0 0.0
    %215 = vmatprep.subr.mxu0 0.0
    %216 = vmatpush1.msra.mxu0 0.0
    %217 = vmatprep.subr.mxu0 0.0
    %218 = vmatpush1.msra.mxu0 0.0
    %219 = vmatprep.subr.mxu0 0.0
    %220 = vmatpush1.msra.mxu0 0.0
    %221 = vmatprep.subr.mxu0 0.0
    %222 = vmatpush1.msra.mxu0 0.0
    %223 = vmatprep.subr.mxu0 0.0
    %224 = vmatpush1.msra.mxu0 0.0
    %225 = vmatprep.subr.mxu0 0.0
    %226 = vmatpush1.msra.mxu0 0.0
    %227 = vmatprep.subr.mxu0 0.0
    %228 = vmatpush1.msra.mxu0 0.0
    %229 = vmatprep.subr.mxu0 0.0
    %230 = vmatpush1.msra.mxu0 0.0
    %231 = vmatprep.subr.mxu0 0.0
    %232 = vmatpush1.msra.mxu0 0.0
    %233 = vmatprep.subr.mxu0 0.0
    %234 = vmatpush1.msra.mxu0 0.0
    %235 = vmatprep.subr.mxu0 0.0
    %236 = vmatpush1.msra.mxu0 0.0
    %237 = vmatprep.subr.mxu0 0.0
    %238 = vmatpush1.msra.mxu0 0.0
    %239 = vmatprep.subr.mxu0 0.0
    %240 = vmatpush1.msra.mxu0 0.0
    %241 = vmatprep.mubr.f32.mxu0 0.0
    %242 = vmatmul.mubr.f32.gmra.mrb[0].mxu0 %v142
    %v243 = vpop.f32.mrb[0].mxu0
    %v244 = vadd.f32 0.0, %v243
    %v245 = vpop.f32.mrb[0].mxu0
    %246 = vmatprep.mubr.f32.mxu0 0.0
    %247 = vmatmul.mubr.f32.gmra.mrb[0].mxu0 %v145
    %v248 = vpop.f32.mrb[0].mxu0
    %v249 = vadd.f32 0.0, %v248
    %v250 = vpop.f32.mrb[0].mxu0
    %251 = vmatprep.mubr.f32.mxu0 0.0
    %252 = vmatmul.mubr.f32.gmra.mrb[0].mxu0 %v148
    %v253 = vpop.f32.mrb[0].mxu0
    %v254 = vadd.f32 0.0, %v253
    %v255 = vpop.f32.mrb[0].mxu0
    %256 = vmatprep.mubr.f32.mxu0 0.0
    %257 = vmatmul.mubr.f32.gmra.mrb[0].mxu0 %v151
    %v258 = vpop.f32.mrb[0].mxu0
    %v259 = vadd.f32 0.0, %v258
    %v260 = vpop.f32.mrb[0].mxu0
    %261 = vmatprep.mubr.f32.mxu0 0.0
    %262 = vmatmul.mubr.f32.gmra.mrb[0].mxu0 %v154
    %v263 = vpop.f32.mrb[0].mxu0
    %v264 = vadd.f32 0.0, %v263
    %v265 = vpop.f32.mrb[0].mxu0
    %266 = vmatprep.mubr.f32.mxu0 0.0
    %267 = vmatmul.mubr.f32.gmra.mrb[0].mxu0 %v157
    %v268 = vpop.f32.mrb[0].mxu0
    %v269 = vadd.f32 0.0, %v268
    %v270 = vpop.f32.mrb[0].mxu0
    %271 = vmatprep.mubr.f32.mxu0 0.0
    %272 = vmatmul.mubr.f32.gmra.mrb[0].mxu0 %v160
    %v273 = vpop.f32.mrb[0].mxu0
    %v274 = vadd.f32 0.0, %v273
    %v275 = vpop.f32.mrb[0].mxu0
    %276 = vmatprep.mubr.f32.mxu0 0.0
    %277 = vmatmul.mubr.f32.gmra.mrb[0].mxu0 %v163
    %v278 = vpop.f32.mrb[0].mxu0
    %v279 = vadd.f32 0.0, %v278
    %v280 = vpop.f32.mrb[0].mxu0
    %281 = vmatprep.mubr.f32.mxu0 0.0
    %282 = vmatmul.mubr.f32.gmra.mrb[0].mxu0 %v166
    %v283 = vpop.f32.mrb[0].mxu0
    %v284 = vadd.f32 0.0, %v283
    %v285 = vpop.f32.mrb[0].mxu0
    %286 = vmatprep.mubr.f32.mxu0 0.0
    %287 = vmatmul.mubr.f32.gmra.mrb[0].mxu0 %v169
    %v288 = vpop.f32.mrb[0].mxu0
    %v289 = vadd.f32 0.0, %v288
    %v290 = vpop.f32.mrb[0].mxu0
    %291 = vmatprep.mubr.f32.mxu0 0.0
    %292 = vmatmul.mubr.f32.gmra.mrb[0].mxu0 %v172
    %v293 = vpop.f32.mrb[0].mxu0
    %v294 = vadd.f32 0.0, %v293
    %v295 = vpop.f32.mrb[0].mxu0
    %296 = vmatprep.mubr.f32.mxu0 0.0
    %297 = vmatmul.mubr.f32.gmra.mrb[0].mxu0 %v175
    %v298 = vpop.f32.mrb[0].mxu0
    %v299 = vadd.f32 0.0, %v298
    %v300 = vpop.f32.mrb[0].mxu0
    %301 = vdwg.mxu0
    %v303 = vsel %vm140, %v244, 0
    %v306 = vsel %vm140, %v249, 0
    %v309 = vsel %vm140, %v254, 0
    %v312 = vsel %vm140, %v259, 0
    %314 = vmatprep.subr.mxu0 0.0
    %315 = vmatpush1.msra.mxu0 %v120
    %316 = vmatprep.subr.mxu0 0.0
    %317 = vmatpush1.msra.mxu0 %v121
    %318 = vmatprep.subr.mxu0 0.0
    %319 = vmatpush1.msra.mxu0 %v122
    %320 = vmatprep.subr.mxu0 0.0
    %321 = vmatpush1.msra.mxu0 %v123
    %322 = vmatprep.subr.mxu0 0.0
    %323 = vmatpush1.msra.mxu0 0.0
    %324 = vmatprep.subr.mxu0 0.0
    %325 = vmatpush1.msra.mxu0 0.0
    %326 = vmatprep.subr.mxu0 0.0
    %327 = vmatpush1.msra.mxu0 0.0
    %328 = vmatprep.subr.mxu0 0.0
    %329 = vmatpush1.msra.mxu0 0.0
    %330 = vmatprep.subr.mxu0 0.0
    %331 = vmatpush1.msra.mxu0 0.0
    %332 = vmatprep.subr.mxu0 0.0
    %333 = vmatpush1.msra.mxu0 0.0
    %334 = vmatprep.subr.mxu0 0.0
    %335 = vmatpush1.msra.mxu0 0.0
    %336 = vmatprep.subr.mxu0 0.0
    %337 = vmatpush1.msra.mxu0 0.0
    %338 = vmatprep.subr.mxu0 0.0
    %339 = vmatpush1.msra.mxu0 0.0
    %340 = vmatprep.subr.mxu0 0.0
    %341 = vmatpush1.msra.mxu0 0.0
    %342 = vmatprep.subr.mxu0 0.0
    %343 = vmatpush1.msra.mxu0 0.0
    %344 = vmatprep.subr.mxu0 0.0
    %345 = vmatpush1.msra.mxu0 0.0
    %346 = vmatprep.subr.mxu0 0.0
    %347 = vmatpush1.msra.mxu0 0.0
    %348 = vmatprep.subr.mxu0 0.0
    %349 = vmatpush1.msra.mxu0 0.0
    %350 = vmatprep.subr.mxu0 0.0
    %351 = vmatpush1.msra.mxu0 0.0
    %352 = vmatprep.subr.mxu0 0.0
    %353 = vmatpush1.msra.mxu0 0.0
    %354 = vmatprep.subr.mxu0 0.0
    %355 = vmatpush1.msra.mxu0 0.0
    %356 = vmatprep.subr.mxu0 0.0
    %357 = vmatpush1.msra.mxu0 0.0
    %358 = vmatprep.subr.mxu0 0.0
    %359 = vmatpush1.msra.mxu0 0.0
    %360 = vmatprep.subr.mxu0 0.0
    %361 = vmatpush1.msra.mxu0 0.0
    %362 = vmatprep.subr.mxu0 0.0
    %363 = vmatpush1.msra.mxu0 0.0
    %364 = vmatprep.subr.mxu0 0.0
    %365 = vmatpush1.msra.mxu0 0.0
    %366 = vmatprep.subr.mxu0 0.0
    %367 = vmatpush1.msra.mxu0 0.0
    %368 = vmatprep.subr.mxu0 0.0
    %369 = vmatpush1.msra.mxu0 0.0
    %370 = vmatprep.subr.mxu0 0.0
    %371 = vmatpush1.msra.mxu0 0.0
    %372 = vmatprep.subr.mxu0 0.0
    %373 = vmatpush1.msra.mxu0 0.0
    %374 = vmatprep.subr.mxu0 0.0
    %375 = vmatpush1.msra.mxu0 0.0
    %376 = vmatprep.subr.mxu0 0.0
    %377 = vmatpush1.msra.mxu0 0.0
    %378 = vmatprep.mubr.f32.mxu0 0.0
    %379 = vmatmul.mubr.f32.gmra.mrb[0].mxu0 %v303
    %v380 = vpop.f32.mrb[0].mxu0
    %v381 = vadd.f32 0.0, %v380
    %v382 = vpop.f32.mrb[0].mxu0
    %383 = vmatprep.mubr.f32.mxu0 0.0
    %384 = vmatmul.mubr.f32.gmra.mrb[0].mxu0 %v306
    %v385 = vpop.f32.mrb[0].mxu0
    %v386 = vadd.f32 0.0, %v385
    %v387 = vpop.f32.mrb[0].mxu0
    %388 = vmatprep.mubr.f32.mxu0 0.0
    %389 = vmatmul.mubr.f32.gmra.mrb[0].mxu0 %v309
    %v390 = vpop.f32.mrb[0].mxu0
    %v391 = vadd.f32 0.0, %v390
    %v392 = vpop.f32.mrb[0].mxu0
    %393 = vmatprep.mubr.f32.mxu0 0.0
    %394 = vmatmul.mubr.f32.gmra.mrb[0].mxu0 %v312
    %v395 = vpop.f32.mrb[0].mxu0
    %v396 = vadd.f32 0.0, %v395
    %v397 = vpop.f32.mrb[0].mxu0
    %398 = vdwg.mxu0
    %v399 = vadd.f32 %v264, %v381
    %v400 = vadd.f32 %v269, %v386
    %v401 = vadd.f32 %v274, %v391
    %v402 = vadd.f32 %v279, %v396
    %v404 = vsel %vm140, %v284, 0
    %v407 = vsel %vm140, %v289, 0
    %v410 = vsel %vm140, %v294, 0
    %v413 = vsel %vm140, %v299, 0
    %415 = vmatprep.subr.mxu0 0.0
    %416 = vmatpush1.msra.mxu0 %v124
    %417 = vmatprep.subr.mxu0 0.0
    %418 = vmatpush1.msra.mxu0 %v125
    %419 = vmatprep.subr.mxu0 0.0
    %420 = vmatpush1.msra.mxu0 %v126
    %421 = vmatprep.subr.mxu0 0.0
    %422 = vmatpush1.msra.mxu0 %v127
    %423 = vmatprep.subr.mxu0 0.0
    %424 = vmatpush1.msra.mxu0 0.0
    %425 = vmatprep.subr.mxu0 0.0
    %426 = vmatpush1.msra.mxu0 0.0
    %427 = vmatprep.subr.mxu0 0.0
    %428 = vmatpush1.msra.mxu0 0.0
    %429 = vmatprep.subr.mxu0 0.0
    %430 = vmatpush1.msra.mxu0 0.0
    %431 = vmatprep.subr.mxu0 0.0
    %432 = vmatpush1.msra.mxu0 0.0
    %433 = vmatprep.subr.mxu0 0.0
    %434 = vmatpush1.msra.mxu0 0.0
    %435 = vmatprep.subr.mxu0 0.0
    %436 = vmatpush1.msra.mxu0 0.0
    %437 = vmatprep.subr.mxu0 0.0
    %438 = vmatpush1.msra.mxu0 0.0
    %439 = vmatprep.subr.mxu0 0.0
    %440 = vmatpush1.msra.mxu0 0.0
    %441 = vmatprep.subr.mxu0 0.0
    %442 = vmatpush1.msra.mxu0 0.0
    %443 = vmatprep.subr.mxu0 0.0
    %444 = vmatpush1.msra.mxu0 0.0
    %445 = vmatprep.subr.mxu0 0.0
    %446 = vmatpush1.msra.mxu0 0.0
    %447 = vmatprep.subr.mxu0 0.0
    %448 = vmatpush1.msra.mxu0 0.0
    %449 = vmatprep.subr.mxu0 0.0
    %450 = vmatpush1.msra.mxu0 0.0
    %451 = vmatprep.subr.mxu0 0.0
    %452 = vmatpush1.msra.mxu0 0.0
    %453 = vmatprep.subr.mxu0 0.0
    %454 = vmatpush1.msra.mxu0 0.0
    %455 = vmatprep.subr.mxu0 0.0
    %456 = vmatpush1.msra.mxu0 0.0
    %457 = vmatprep.subr.mxu0 0.0
    %458 = vmatpush1.msra.mxu0 0.0
    %459 = vmatprep.subr.mxu0 0.0
    %460 = vmatpush1.msra.mxu0 0.0
    %461 = vmatprep.subr.mxu0 0.0
    %462 = vmatpush1.msra.mxu0 0.0
    %463 = vmatprep.subr.mxu0 0.0
    %464 = vmatpush1.msra.mxu0 0.0
    %465 = vmatprep.subr.mxu0 0.0
    %466 = vmatpush1.msra.mxu0 0.0
    %467 = vmatprep.subr.mxu0 0.0
    %468 = vmatpush1.msra.mxu0 0.0
    %469 = vmatprep.subr.mxu0 0.0
    %470 = vmatpush1.msra.mxu0 0.0
    %471 = vmatprep.subr.mxu0 0.0
    %472 = vmatpush1.msra.mxu0 0.0
    %473 = vmatprep.subr.mxu0 0.0
    %474 = vmatpush1.msra.mxu0 0.0
    %475 = vmatprep.subr.mxu0 0.0
    %476 = vmatpush1.msra.mxu0 0.0
    %477 = vmatprep.subr.mxu0 0.0
    %478 = vmatpush1.msra.mxu0 0.0
    %479 = vmatprep.mubr.f32.mxu0 0.0
    %480 = vmatmul.mubr.f32.gmra.mrb[0].mxu0 %v404
    %v481 = vpop.f32.mrb[0].mxu0
    %v482 = vadd.f32 0.0, %v481
    %v483 = vpop.f32.mrb[0].mxu0
    %484 = vmatprep.mubr.f32.mxu0 0.0
    %485 = vmatmul.mubr.f32.gmra.mrb[0].mxu0 %v407
    %v486 = vpop.f32.mrb[0].mxu0
    %v487 = vadd.f32 0.0, %v486
    %v488 = vpop.f32.mrb[0].mxu0
    %489 = vmatprep.mubr.f32.mxu0 0.0
    %490 = vmatmul.mubr.f32.gmra.mrb[0].mxu0 %v410
    %v491 = vpop.f32.mrb[0].mxu0
    %v492 = vadd.f32 0.0, %v491
    %v493 = vpop.f32.mrb[0].mxu0
    %494 = vmatprep.mubr.f32.mxu0 0.0
    %495 = vmatmul.mubr.f32.gmra.mrb[0].mxu0 %v413
    %v496 = vpop.f32.mrb[0].mxu0
    %v497 = vadd.f32 0.0, %v496
    %v498 = vpop.f32.mrb[0].mxu0
    %499 = vdwg.mxu0
    %v500 = vadd.f32 %v399, %v482
    %v501 = vadd.f32 %v400, %v487
    %v502 = vadd.f32 %v401, %v492
    %v503 = vadd.f32 %v402, %v497
    %v504 = vld [vmem:[%s1 + $0x160] sm:$0xff]
    %v505 = vld [vmem:[%s1 + $0x168] sm:$0xff]
    %v506 = vld [vmem:[%s1 + $0x170] sm:$0xff]
    %v507 = vld [vmem:[%s1 + $0x178] sm:$0xff]
    %509 = vset.pattern.permute.xlu0 0
    %510 = vperm.xlu0 %509, %v504
    %v511 = vpop.permute.xlu0 %510
    %514 = vset.pattern.permute.xlu0 0
    %515 = vperm.xlu0 %514, %v505
    %v516 = vpop.permute.xlu0 %515
    %519 = vset.pattern.permute.xlu0 0
    %520 = vperm.xlu0 %519, %v506
    %v521 = vpop.permute.xlu0 %520
    %524 = vset.pattern.permute.xlu0 0
    %525 = vperm.xlu0 %524, %v507
    %v526 = vpop.permute.xlu0 %525
    %v528 = vadd.f32 %v500, %v511
    %v529 = vadd.f32 %v501, %v516
    %v530 = vadd.f32 %v502, %v521
    %v531 = vadd.f32 %v503, %v526
    %v532 = vmul.f32 %v528, 0.1
    %v533 = vmul.f32 %v529, 0.1
    %v534 = vmul.f32 %v530, 0.1
    %v535 = vmul.f32 %v531, 0.1
    %v536 = vmax.f32 %v528, %v532
    %v537 = vmax.f32 %v529, %v533
    %v538 = vmax.f32 %v530, %v534
    %v539 = vmax.f32 %v531, %v535
    %v540 = vld [vmem:[%s1 + $0x80] sm:$0xff]
    %v541 = vld [vmem:[%s1 + $0x88] sm:$0xff]
    %v542 = vld [vmem:[%s1 + $0x90] sm:$0xff]
    %v543 = vld [vmem:[%s1 + $0x98] sm:$0xff]
    %v544 = vld [vmem:[%s1 + $0xa0] sm:$0xff]
    %v545 = vld [vmem:[%s1 + $0xa8] sm:$0xff]
    %v546 = vld [vmem:[%s1 + $0xb0] sm:$0xff]
    %v547 = vld [vmem:[%s1 + $0xb8] sm:$0xff]
    %v548 = vld [vmem:[%s1 + $0xc0] sm:$0xff]
    %v549 = vld [vmem:[%s1 + $0xc8] sm:$0xff]
    %v550 = vld [vmem:[%s1 + $0xd0] sm:$0xff]
    %v551 = vld [vmem:[%s1 + $0xd8] sm:$0xff]
    %v553 = vsel %vm140, %v540, 0
    %v556 = vsel %vm140, %v541, 0
    %v559 = vsel %vm140, %v542, 0
    %v562 = vsel %vm140, %v543, 0
    %v565 = vsel %vm140, %v544, 0
    %v568 = vsel %vm140, %v545, 0
    %v571 = vsel %vm140, %v546, 0
    %v574 = vsel %vm140, %v547, 0
    %v577 = vsel %vm140, %v548, 0
    %v580 = vsel %vm140, %v549, 0
    %v583 = vsel %vm140, %v550, 0
    %v586 = vsel %vm140, %v551, 0
    %588 = vmatprep.subr.mxu0 0.0
    %589 = vmatpush1.msra.mxu0 %v536
    %590 = vmatprep.subr.mxu0 0.0
    %591 = vmatpush1.msra.mxu0 %v537
    %592 = vmatprep.subr.mxu0 0.0
    %593 = vmatpush1.msra.mxu0 %v538
    %594 = vmatprep.subr.mxu0 0.0
    %595 = vmatpush1.msra.mxu0 %v539
    %596 = vmatprep.subr.mxu0 0.0
    %597 = vmatpush1.msra.mxu0 0.0
    %598 = vmatprep.subr.mxu0 0.0
    %599 = vmatpush1.msra.mxu0 0.0
    %600 = vmatprep.subr.mxu0 0.0
    %601 = vmatpush1.msra.mxu0 0.0
    %602 = vmatprep.subr.mxu0 0.0
    %603 = vmatpush1.msra.mxu0 0.0
    %604 = vmatprep.subr.mxu0 0.0
    %605 = vmatpush1.msra.mxu0 0.0
    %606 = vmatprep.subr.mxu0 0.0
    %607 = vmatpush1.msra.mxu0 0.0
    %608 = vmatprep.subr.mxu0 0.0
    %609 = vmatpush1.msra.mxu0 0.0
    %610 = vmatprep.subr.mxu0 0.0
    %611 = vmatpush1.msra.mxu0 0.0
    %612 = vmatprep.subr.mxu0 0.0
    %613 = vmatpush1.msra.mxu0 0.0
    %614 = vmatprep.subr.mxu0 0.0
    %615 = vmatpush1.msra.mxu0 0.0
    %616 = vmatprep.subr.mxu0 0.0
    %617 = vmatpush1.msra.mxu0 0.0
    %618 = vmatprep.subr.mxu0 0.0
    %619 = vmatpush1.msra.mxu0 0.0
    %620 = vmatprep.subr.mxu0 0.0
    %621 = vmatpush1.msra.mxu0 0.0
    %622 = vmatprep.subr.mxu0 0.0
    %623 = vmatpush1.msra.mxu0 0.0
    %624 = vmatprep.subr.mxu0 0.0
    %625 = vmatpush1.msra.mxu0 0.0
    %626 = vmatprep.subr.mxu0 0.0
    %627 = vmatpush1.msra.mxu0 0.0
    %628 = vmatprep.subr.mxu0 0.0
    %629 = vmatpush1.msra.mxu0 0.0
    %630 = vmatprep.subr.mxu0 0.0
    %631 = vmatpush1.msra.mxu0 0.0
    %632 = vmatprep.subr.mxu0 0.0
    %633 = vmatpush1.msra.mxu0 0.0
    %634 = vmatprep.subr.mxu0 0.0
    %635 = vmatpush1.msra.mxu0 0.0
    %636 = vmatprep.subr.mxu0 0.0
    %637 = vmatpush1.msra.mxu0 0.0
    %638 = vmatprep.subr.mxu0 0.0
    %639 = vmatpush1.msra.mxu0 0.0
    %640 = vmatprep.subr.mxu0 0.0
    %641 = vmatpush1.msra.mxu0 0.0
    %642 = vmatprep.subr.mxu0 0.0
    %643 = vmatpush1.msra.mxu0 0.0
    %644 = vmatprep.subr.mxu0 0.0
    %645 = vmatpush1.msra.mxu0 0.0
    %646 = vmatprep.subr.mxu0 0.0
    %647 = vmatpush1.msra.mxu0 0.0
    %648 = vmatprep.subr.mxu0 0.0
    %649 = vmatpush1.msra.mxu0 0.0
    %650 = vmatprep.subr.mxu0 0.0
    %651 = vmatpush1.msra.mxu0 0.0
    %652 = vmatprep.mubr.f32.mxu0 0.0
    %653 = vmatmul.mubr.f32.gmra.mrb[0].mxu0 %v553
    %v654 = vpop.f32.mrb[0].mxu0
    %v655 = vadd.f32 0.0, %v654
    %v656 = vpop.f32.mrb[0].mxu0
    %657 = vmatprep.mubr.f32.mxu0 0.0
    %658 = vmatmul.mubr.f32.gmra.mrb[0].mxu0 %v556
    %v659 = vpop.f32.mrb[0].mxu0
    %v660 = vadd.f32 0.0, %v659
    %v661 = vpop.f32.mrb[0].mxu0
    %662 = vmatprep.mubr.f32.mxu0 0.0
    %663 = vmatmul.mubr.f32.gmra.mrb[0].mxu0 %v559
    %v664 = vpop.f32.mrb[0].mxu0
    %v665 = vadd.f32 0.0, %v664
    %v666 = vpop.f32.mrb[0].mxu0
    %667 = vmatprep.mubr.f32.mxu0 0.0
    %668 = vmatmul.mubr.f32.gmra.mrb[0].mxu0 %v562
    %v669 = vpop.f32.mrb[0].mxu0
    %v670 = vadd.f32 0.0, %v669
    %v671 = vpop.f32.mrb[0].mxu0
    %672 = vmatprep.mubr.f32.mxu0 0.0
    %673 = vmatmul.mubr.f32.gmra.mrb[0].mxu0 %v565
    %v674 = vpop.f32.mrb[0].mxu0
    %v675 = vadd.f32 0.0, %v674
    %v676 = vpop.f32.mrb[0].mxu0
    %677 = vmatprep.mubr.f32.mxu0 0.0
    %678 = vmatmul.mubr.f32.gmra.mrb[0].mxu0 %v568
    %v679 = vpop.f32.mrb[0].mxu0
    %v680 = vadd.f32 0.0, %v679
    %v681 = vpop.f32.mrb[0].mxu0
    %682 = vmatprep.mubr.f32.mxu0 0.0
    %683 = vmatmul.mubr.f32.gmra.mrb[0].mxu0 %v571
    %v684 = vpop.f32.mrb[0].mxu0
    %v685 = vadd.f32 0.0, %v684
    %v686 = vpop.f32.mrb[0].mxu0
    %687 = vmatprep.mubr.f32.mxu0 0.0
    %688 = vmatmul.mubr.f32.gmra.mrb[0].mxu0 %v574
    %v689 = vpop.f32.mrb[0].mxu0
    %v690 = vadd.f32 0.0, %v689
    %v691 = vpop.f32.mrb[0].mxu0
    %692 = vmatprep.mubr.f32.mxu0 0.0
    %693 = vmatmul.mubr.f32.gmra.mrb[0].mxu0 %v577
    %v694 = vpop.f32.mrb[0].mxu0
    %v695 = vadd.f32 0.0, %v694
    %v696 = vpop.f32.mrb[0].mxu0
    %697 = vmatprep.mubr.f32.mxu0 0.0
    %698 = vmatmul.mubr.f32.gmra.mrb[0].mxu0 %v580
    %v699 = vpop.f32.mrb[0].mxu0
    %v700 = vadd.f32 0.0, %v699
    %v701 = vpop.f32.mrb[0].mxu0
    %702 = vmatprep.mubr.f32.mxu0 0.0
    %703 = vmatmul.mubr.f32.gmra.mrb[0].mxu0 %v583
    %v704 = vpop.f32.mrb[0].mxu0
    %v705 = vadd.f32 0.0, %v704
    %v706 = vpop.f32.mrb[0].mxu0
    %707 = vmatprep.mubr.f32.mxu0 0.0
    %708 = vmatmul.mubr.f32.gmra.mrb[0].mxu0 %v586
    %v709 = vpop.f32.mrb[0].mxu0
    %v710 = vadd.f32 0.0, %v709
    %v711 = vpop.f32.mrb[0].mxu0
    %712 = vdwg.mxu0
    %v714 = vsel %vm140, %v655, 0
    %v717 = vsel %vm140, %v660, 0
    %v720 = vsel %vm140, %v665, 0
    %v723 = vsel %vm140, %v670, 0
    %725 = vmatprep.subr.mxu0 0.0
    %726 = vmatpush1.msra.mxu0 %v120
    %727 = vmatprep.subr.mxu0 0.0
    %728 = vmatpush1.msra.mxu0 %v121
    %729 = vmatprep.subr.mxu0 0.0
    %730 = vmatpush1.msra.mxu0 %v122
    %731 = vmatprep.subr.mxu0 0.0
    %732 = vmatpush1.msra.mxu0 %v123
    %733 = vmatprep.subr.mxu0 0.0
    %734 = vmatpush1.msra.mxu0 0.0
    %735 = vmatprep.subr.mxu0 0.0
    %736 = vmatpush1.msra.mxu0 0.0
    %737 = vmatprep.subr.mxu0 0.0
    %738 = vmatpush1.msra.mxu0 0.0
    %739 = vmatprep.subr.mxu0 0.0
    %740 = vmatpush1.msra.mxu0 0.0
    %741 = vmatprep.subr.mxu0 0.0
    %742 = vmatpush1.msra.mxu0 0.0
    %743 = vmatprep.subr.mxu0 0.0
    %744 = vmatpush1.msra.mxu0 0.0
    %745 = vmatprep.subr.mxu0 0.0
    %746 = vmatpush1.msra.mxu0 0.0
    %747 = vmatprep.subr.mxu0 0.0
    %748 = vmatpush1.msra.mxu0 0.0
    %749 = vmatprep.subr.mxu0 0.0
    %750 = vmatpush1.msra.mxu0 0.0
    %751 = vmatprep.subr.mxu0 0.0
    %752 = vmatpush1.msra.mxu0 0.0
    %753 = vmatprep.subr.mxu0 0.0
    %754 = vmatpush1.msra.mxu0 0.0
    %755 = vmatprep.subr.mxu0 0.0
    %756 = vmatpush1.msra.mxu0 0.0
    %757 = vmatprep.subr.mxu0 0.0
    %758 = vmatpush1.msra.mxu0 0.0
    %759 = vmatprep.subr.mxu0 0.0
    %760 = vmatpush1.msra.mxu0 0.0
    %761 = vmatprep.subr.mxu0 0.0
    %762 = vmatpush1.msra.mxu0 0.0
    %763 = vmatprep.subr.mxu0 0.0
    %764 = vmatpush1.msra.mxu0 0.0
    %765 = vmatprep.subr.mxu0 0.0
    %766 = vmatpush1.msra.mxu0 0.0
    %767 = vmatprep.subr.mxu0 0.0
    %768 = vmatpush1.msra.mxu0 0.0
    %769 = vmatprep.subr.mxu0 0.0
    %770 = vmatpush1.msra.mxu0 0.0
    %771 = vmatprep.subr.mxu0 0.0
    %772 = vmatpush1.msra.mxu0 0.0
    %773 = vmatprep.subr.mxu0 0.0
    %774 = vmatpush1.msra.mxu0 0.0
    %775 = vmatprep.subr.mxu0 0.0
    %776 = vmatpush1.msra.mxu0 0.0
    %777 = vmatprep.subr.mxu0 0.0
    %778 = vmatpush1.msra.mxu0 0.0
    %779 = vmatprep.subr.mxu0 0.0
    %780 = vmatpush1.msra.mxu0 0.0
    %781 = vmatprep.subr.mxu0 0.0
    %782 = vmatpush1.msra.mxu0 0.0
    %783 = vmatprep.subr.mxu0 0.0
    %784 = vmatpush1.msra.mxu0 0.0
    %785 = vmatprep.subr.mxu0 0.0
    %786 = vmatpush1.msra.mxu0 0.0
    %787 = vmatprep.subr.mxu0 0.0
    %788 = vmatpush1.msra.mxu0 0.0
    %789 = vmatprep.mubr.f32.mxu0 0.0
    %790 = vmatmul.mubr.f32.gmra.mrb[0].mxu0 %v714
    %v791 = vpop.f32.mrb[0].mxu0
    %v792 = vadd.f32 0.0, %v791
    %v793 = vpop.f32.mrb[0].mxu0
    %794 = vmatprep.mubr.f32.mxu0 0.0
    %795 = vmatmul.mubr.f32.gmra.mrb[0].mxu0 %v717
    %v796 = vpop.f32.mrb[0].mxu0
    %v797 = vadd.f32 0.0, %v796
    %v798 = vpop.f32.mrb[0].mxu0
    %799 = vmatprep.mubr.f32.mxu0 0.0
    %800 = vmatmul.mubr.f32.gmra.mrb[0].mxu0 %v720
    %v801 = vpop.f32.mrb[0].mxu0
    %v802 = vadd.f32 0.0, %v801
    %v803 = vpop.f32.mrb[0].mxu0
    %804 = vmatprep.mubr.f32.mxu0 0.0
    %805 = vmatmul.mubr.f32.gmra.mrb[0].mxu0 %v723
    %v806 = vpop.f32.mrb[0].mxu0
    %v807 = vadd.f32 0.0, %v806
    %v808 = vpop.f32.mrb[0].mxu0
    %809 = vdwg.mxu0
    %v810 = vadd.f32 %v675, %v792
    %v811 = vadd.f32 %v680, %v797
    %v812 = vadd.f32 %v685, %v802
    %v813 = vadd.f32 %v690, %v807
    %v815 = vsel %vm140, %v695, 0
    %v818 = vsel %vm140, %v700, 0
    %v821 = vsel %vm140, %v705, 0
    %v824 = vsel %vm140, %v710, 0
    %826 = vmatprep.subr.mxu0 0.0
    %827 = vmatpush1.msra.mxu0 %v124
    %828 = vmatprep.subr.mxu0 0.0
    %829 = vmatpush1.msra.mxu0 %v125
    %830 = vmatprep.subr.mxu0 0.0
    %831 = vmatpush1.msra.mxu0 %v126
    %832 = vmatprep.subr.mxu0 0.0
    %833 = vmatpush1.msra.mxu0 %v127
    %834 = vmatprep.subr.mxu0 0.0
    %835 = vmatpush1.msra.mxu0 0.0
    %836 = vmatprep.subr.mxu0 0.0
    %837 = vmatpush1.msra.mxu0 0.0
    %838 = vmatprep.subr.mxu0 0.0
    %839 = vmatpush1.msra.mxu0 0.0
    %840 = vmatprep.subr.mxu0 0.0
    %841 = vmatpush1.msra.mxu0 0.0
    %842 = vmatprep.subr.mxu0 0.0
    %843 = vmatpush1.msra.mxu0 0.0
    %844 = vmatprep.subr.mxu0 0.0
    %845 = vmatpush1.msra.mxu0 0.0
    %846 = vmatprep.subr.mxu0 0.0
    %847 = vmatpush1.msra.mxu0 0.0
    %848 = vmatprep.subr.mxu0 0.0
    %849 = vmatpush1.msra.mxu0 0.0
    %850 = vmatprep.subr.mxu0 0.0
    %851 = vmatpush1.msra.mxu0 0.0
    %852 = vmatprep.subr.mxu0 0.0
    %853 = vmatpush1.msra.mxu0 0.0
    %854 = vmatprep.subr.mxu0 0.0
    %855 = vmatpush1.msra.mxu0 0.0
    %856 = vmatprep.subr.mxu0 0.0
    %857 = vmatpush1.msra.mxu0 0.0
    %858 = vmatprep.subr.mxu0 0.0
    %859 = vmatpush1.msra.mxu0 0.0
    %860 = vmatprep.subr.mxu0 0.0
    %861 = vmatpush1.msra.mxu0 0.0
    %862 = vmatprep.subr.mxu0 0.0
    %863 = vmatpush1.msra.mxu0 0.0
    %864 = vmatprep.subr.mxu0 0.0
    %865 = vmatpush1.msra.mxu0 0.0
    %866 = vmatprep.subr.mxu0 0.0
    %867 = vmatpush1.msra.mxu0 0.0
    %868 = vmatprep.subr.mxu0 0.0
    %869 = vmatpush1.msra.mxu0 0.0
    %870 = vmatprep.subr.mxu0 0.0
    %871 = vmatpush1.msra.mxu0 0.0
    %872 = vmatprep.subr.mxu0 0.0
    %873 = vmatpush1.msra.mxu0 0.0
    %874 = vmatprep.subr.mxu0 0.0
    %875 = vmatpush1.msra.mxu0 0.0
    %876 = vmatprep.subr.mxu0 0.0
    %877 = vmatpush1.msra.mxu0 0.0
    %878 = vmatprep.subr.mxu0 0.0
    %879 = vmatpush1.msra.mxu0 0.0
    %880 = vmatprep.subr.mxu0 0.0
    %881 = vmatpush1.msra.mxu0 0.0
    %882 = vmatprep.subr.mxu0 0.0
    %883 = vmatpush1.msra.mxu0 0.0
    %884 = vmatprep.subr.mxu0 0.0
    %885 = vmatpush1.msra.mxu0 0.0
    %886 = vmatprep.subr.mxu0 0.0
    %887 = vmatpush1.msra.mxu0 0.0
    %888 = vmatprep.subr.mxu0 0.0
    %889 = vmatpush1.msra.mxu0 0.0
    %890 = vmatprep.mubr.f32.mxu0 0.0
    %891 = vmatmul.mubr.f32.gmra.mrb[0].mxu0 %v815
    %v892 = vpop.f32.mrb[0].mxu0
    %v893 = vadd.f32 0.0, %v892
    %v894 = vpop.f32.mrb[0].mxu0
    %895 = vmatprep.mubr.f32.mxu0 0.0
    %896 = vmatmul.mubr.f32.gmra.mrb[0].mxu0 %v818
    %v897 = vpop.f32.mrb[0].mxu0
    %v898 = vadd.f32 0.0, %v897
    %v899 = vpop.f32.mrb[0].mxu0
    %900 = vmatprep.mubr.f32.mxu0 0.0
    %901 = vmatmul.mubr.f32.gmra.mrb[0].mxu0 %v821
    %v902 = vpop.f32.mrb[0].mxu0
    %v903 = vadd.f32 0.0, %v902
    %v904 = vpop.f32.mrb[0].mxu0
    %905 = vmatprep.mubr.f32.mxu0 0.0
    %906 = vmatmul.mubr.f32.gmra.mrb[0].mxu0 %v824
    %v907 = vpop.f32.mrb[0].mxu0
    %v908 = vadd.f32 0.0, %v907
    %v909 = vpop.f32.mrb[0].mxu0
    %910 = vdwg.mxu0
    %v911 = vadd.f32 %v810, %v893
    %v912 = vadd.f32 %v811, %v898
    %v913 = vadd.f32 %v812, %v903
    %v914 = vadd.f32 %v813, %v908
    %915 = vset.pattern.permute.xlu0 1
    %916 = vperm.xlu0 %915, %v504
    %v917 = vpop.permute.xlu0 %916
    %919 = vset.pattern.permute.xlu0 1
    %920 = vperm.xlu0 %919, %v505
    %v921 = vpop.permute.xlu0 %920
    %923 = vset.pattern.permute.xlu0 1
    %924 = vperm.xlu0 %923, %v506
    %v925 = vpop.permute.xlu0 %924
    %927 = vset.pattern.permute.xlu0 1
    %928 = vperm.xlu0 %927, %v507
    %v929 = vpop.permute.xlu0 %928
    %v931 = vadd.f32 %v911, %v917
    %v932 = vadd.f32 %v912, %v921
    %v933 = vadd.f32 %v913, %v925
    %v934 = vadd.f32 %v914, %v929
    %v935 = vmul.f32 %v931, 0.1
    %v936 = vmul.f32 %v932, 0.1
    %v937 = vmul.f32 %v933, 0.1
    %v938 = vmul.f32 %v934, 0.1
    %v939 = vmax.f32 %v931, %v935
    %v940 = vmax.f32 %v932, %v936
    %v941 = vmax.f32 %v933, %v937
    %v942 = vmax.f32 %v934, %v938
    %v943 = vld [vmem:[%s1 + $0xe0] sm:$0xff]
    %v944 = vld [vmem:[%s1 + $0xe8] sm:$0xff]
    %v945 = vld [vmem:[%s1 + $0xf0] sm:$0xff]
    %v946 = vld [vmem:[%s1 + $0xf8] sm:$0xff]
    %947 = vset.pattern.permute.xlu0 2
    %948 = vperm.xlu0 %947, %v504
    %v949 = vpop.permute.xlu0 %948
    %951 = vset.pattern.permute.xlu0 2
    %952 = vperm.xlu0 %951, %v505
    %v953 = vpop.permute.xlu0 %952
    %955 = vset.pattern.permute.xlu0 2
    %956 = vperm.xlu0 %955, %v506
    %v957 = vpop.permute.xlu0 %956
    %959 = vset.pattern.permute.xlu0 2
    %960 = vperm.xlu0 %959, %v507
    %v961 = vpop.permute.xlu0 %960
    %v964 = vsel %vm140, %v943, 0
    %v967 = vsel %vm140, %v944, 0
    %v970 = vsel %vm140, %v945, 0
    %v973 = vsel %vm140, %v946, 0
    %975 = vmatprep.subr.mxu0 0.0
    %976 = vmatpush1.msra.mxu0 %v102
    %977 = vmatprep.subr.mxu0 0.0
    %978 = vmatpush1.msra.mxu0 %v107
    %979 = vmatprep.subr.mxu0 0.0
    %980 = vmatpush1.msra.mxu0 %v112
    %981 = vmatprep.subr.mxu0 0.0
    %982 = vmatpush1.msra.mxu0 %v117
    %983 = vmatprep.subr.mxu0 0.0
    %984 = vmatpush1.msra.mxu0 0.0
    %985 = vmatprep.subr.mxu0 0.0
    %986 = vmatpush1.msra.mxu0 0.0
    %987 = vmatprep.subr.mxu0 0.0
    %988 = vmatpush1.msra.mxu0 0.0
    %989 = vmatprep.subr.mxu0 0.0
    %990 = vmatpush1.msra.mxu0 0.0
    %991 = vmatprep.subr.mxu0 0.0
    %992 = vmatpush1.msra.mxu0 0.0
    %993 = vmatprep.subr.mxu0 0.0
    %994 = vmatpush1.msra.mxu0 0.0
    %995 = vmatprep.subr.mxu0 0.0
    %996 = vmatpush1.msra.mxu0 0.0
    %997 = vmatprep.subr.mxu0 0.0
    %998 = vmatpush1.msra.mxu0 0.0
    %999 = vmatprep.subr.mxu0 0.0
    %1000 = vmatpush1.msra.mxu0 0.0
    %1001 = vmatprep.subr.mxu0 0.0
    %1002 = vmatpush1.msra.mxu0 0.0
    %1003 = vmatprep.subr.mxu0 0.0
    %1004 = vmatpush1.msra.mxu0 0.0
    %1005 = vmatprep.subr.mxu0 0.0
    %1006 = vmatpush1.msra.mxu0 0.0
    %1007 = vmatprep.subr.mxu0 0.0
    %1008 = vmatpush1.msra.mxu0 0.0
    %1009 = vmatprep.subr.mxu0 0.0
    %1010 = vmatpush1.msra.mxu0 0.0
    %1011 = vmatprep.subr.mxu0 0.0
    %1012 = vmatpush1.msra.mxu0 0.0
    %1013 = vmatprep.subr.mxu0 0.0
    %1014 = vmatpush1.msra.mxu0 0.0
    %1015 = vmatprep.subr.mxu0 0.0
    %1016 = vmatpush1.msra.mxu0 0.0
    %1017 = vmatprep.subr.mxu0 0.0
    %1018 = vmatpush1.msra.mxu0 0.0
    %1019 = vmatprep.subr.mxu0 0.0
    %1020 = vmatpush1.msra.mxu0 0.0
    %1021 = vmatprep.subr.mxu0 0.0
    %1022 = vmatpush1.msra.mxu0 0.0
    %1023 = vmatprep.subr.mxu0 0.0
    %1024 = vmatpush1.msra.mxu0 0.0
    %1025 = vmatprep.subr.mxu0 0.0
    %1026 = vmatpush1.msra.mxu0 0.0
    %1027 = vmatprep.subr.mxu0 0.0
    %1028 = vmatpush1.msra.mxu0 0.0
    %1029 = vmatprep.subr.mxu0 0.0
    %1030 = vmatpush1.msra.mxu0 0.0
    %1031 = vmatprep.subr.mxu0 0.0
    %1032 = vmatpush1.msra.mxu0 0.0
    %1033 = vmatprep.subr.mxu0 0.0
    %1034 = vmatpush1.msra.mxu0 0.0
    %1035 = vmatprep.subr.mxu0 0.0
    %1036 = vmatpush1.msra.mxu0 0.0
    %1037 = vmatprep.subr.mxu0 0.0
    %1038 = vmatpush1.msra.mxu0 0.0
    %1039 = vmatprep.mubr.f32.mxu0 0.0
    %1040 = vmatmul.mubr.f32.gmra.mrb[0].mxu0 %v964
    %v1041 = vpop.f32.mrb[0].mxu0
    %v1042 = vadd.f32 %v949, %v1041
    %v1043 = vpop.f32.mrb[0].mxu0
    %1044 = vmatprep.mubr.f32.mxu0 0.0
    %1045 = vmatmul.mubr.f32.gmra.mrb[0].mxu0 %v967
    %v1046 = vpop.f32.mrb[0].mxu0
    %v1047 = vadd.f32 %v953, %v1046
    %v1048 = vpop.f32.mrb[0].mxu0
    %1049 = vmatprep.mubr.f32.mxu0 0.0
    %1050 = vmatmul.mubr.f32.gmra.mrb[0].mxu0 %v970
    %v1051 = vpop.f32.mrb[0].mxu0
    %v1052 = vadd.f32 %v957, %v1051
    %v1053 = vpop.f32.mrb[0].mxu0
    %1054 = vmatprep.mubr.f32.mxu0 0.0
    %1055 = vmatmul.mubr.f32.gmra.mrb[0].mxu0 %v973
    %v1056 = vpop.f32.mrb[0].mxu0
    %v1057 = vadd.f32 %v961, %v1056
    %v1058 = vpop.f32.mrb[0].mxu0
    %1059 = vdwg.mxu0
    %v1060 = vmul.f32 %v1042, 0.1
    %v1061 = vmul.f32 %v1047, 0.1
    %v1062 = vmul.f32 %v1052, 0.1
    %v1063 = vmul.f32 %v1057, 0.1
    %v1064 = vmax.f32 %v1042, %v1060
    %v1065 = vmax.f32 %v1047, %v1061
    %v1066 = vmax.f32 %v1052, %v1062
    %v1067 = vmax.f32 %v1057, %v1063
    %v1068 = vld [vmem:[%s1 + $0x100] sm:$0xff]
    %v1069 = vld [vmem:[%s1 + $0x108] sm:$0xff]
    %v1070 = vld [vmem:[%s1 + $0x110] sm:$0xff]
    %v1071 = vld [vmem:[%s1 + $0x118] sm:$0xff]
    %1072 = vset.pattern.permute.xlu0 3
    %1073 = vperm.xlu0 %1072, %v504
    %v1074 = vpop.permute.xlu0 %1073
    %1076 = vset.pattern.permute.xlu0 3
    %1077 = vperm.xlu0 %1076, %v505
    %v1078 = vpop.permute.xlu0 %1077
    %1080 = vset.pattern.permute.xlu0 3
    %1081 = vperm.xlu0 %1080, %v506
    %v1082 = vpop.permute.xlu0 %1081
    %1084 = vset.pattern.permute.xlu0 3
    %1085 = vperm.xlu0 %1084, %v507
    %v1086 = vpop.permute.xlu0 %1085
    %v1089 = vsel %vm140, %v1068, 0
    %v1092 = vsel %vm140, %v1069, 0
    %v1095 = vsel %vm140, %v1070, 0
    %v1098 = vsel %vm140, %v1071, 0
    %1100 = vmatprep.subr.mxu0 0.0
    %1101 = vmatpush1.msra.mxu0 %v1064
    %1102 = vmatprep.subr.mxu0 0.0
    %1103 = vmatpush1.msra.mxu0 %v1065
    %1104 = vmatprep.subr.mxu0 0.0
    %1105 = vmatpush1.msra.mxu0 %v1066
    %1106 = vmatprep.subr.mxu0 0.0
    %1107 = vmatpush1.msra.mxu0 %v1067
    %1108 = vmatprep.subr.mxu0 0.0
    %1109 = vmatpush1.msra.mxu0 0.0
    %1110 = vmatprep.subr.mxu0 0.0
    %1111 = vmatpush1.msra.mxu0 0.0
    %1112 = vmatprep.subr.mxu0 0.0
    %1113 = vmatpush1.msra.mxu0 0.0
    %1114 = vmatprep.subr.mxu0 0.0
    %1115 = vmatpush1.msra.mxu0 0.0
    %1116 = vmatprep.subr.mxu0 0.0
    %1117 = vmatpush1.msra.mxu0 0.0
    %1118 = vmatprep.subr.mxu0 0.0
    %1119 = vmatpush1.msra.mxu0 0.0
    %1120 = vmatprep.subr.mxu0 0.0
    %1121 = vmatpush1.msra.mxu0 0.0
    %1122 = vmatprep.subr.mxu0 0.0
    %1123 = vmatpush1.msra.mxu0 0.0
    %1124 = vmatprep.subr.mxu0 0.0
    %1125 = vmatpush1.msra.mxu0 0.0
    %1126 = vmatprep.subr.mxu0 0.0
    %1127 = vmatpush1.msra.mxu0 0.0
    %1128 = vmatprep.subr.mxu0 0.0
    %1129 = vmatpush1.msra.mxu0 0.0
    %1130 = vmatprep.subr.mxu0 0.0
    %1131 = vmatpush1.msra.mxu0 0.0
    %1132 = vmatprep.subr.mxu0 0.0
    %1133 = vmatpush1.msra.mxu0 0.0
    %1134 = vmatprep.subr.mxu0 0.0
    %1135 = vmatpush1.msra.mxu0 0.0
    %1136 = vmatprep.subr.mxu0 0.0
    %1137 = vmatpush1.msra.mxu0 0.0
    %1138 = vmatprep.subr.mxu0 0.0
    %1139 = vmatpush1.msra.mxu0 0.0
    %1140 = vmatprep.subr.mxu0 0.0
    %1141 = vmatpush1.msra.mxu0 0.0
    %1142 = vmatprep.subr.mxu0 0.0
    %1143 = vmatpush1.msra.mxu0 0.0
    %1144 = vmatprep.subr.mxu0 0.0
    %1145 = vmatpush1.msra.mxu0 0.0
    %1146 = vmatprep.subr.mxu0 0.0
    %1147 = vmatpush1.msra.mxu0 0.0
    %1148 = vmatprep.subr.mxu0 0.0
    %1149 = vmatpush1.msra.mxu0 0.0
    %1150 = vmatprep.subr.mxu0 0.0
    %1151 = vmatpush1.msra.mxu0 0.0
    %1152 = vmatprep.subr.mxu0 0.0
    %1153 = vmatpush1.msra.mxu0 0.0
    %1154 = vmatprep.subr.mxu0 0.0
    %1155 = vmatpush1.msra.mxu0 0.0
    %1156 = vmatprep.subr.mxu0 0.0
    %1157 = vmatpush1.msra.mxu0 0.0
    %1158 = vmatprep.subr.mxu0 0.0
    %1159 = vmatpush1.msra.mxu0 0.0
    %1160 = vmatprep.subr.mxu0 0.0
    %1161 = vmatpush1.msra.mxu0 0.0
    %1162 = vmatprep.subr.mxu0 0.0
    %1163 = vmatpush1.msra.mxu0 0.0
    %1164 = vmatprep.mubr.f32.mxu0 0.0
    %1165 = vmatmul.mubr.f32.gmra.mrb[0].mxu0 %v1089
    %v1166 = vpop.f32.mrb[0].mxu0
    %v1167 = vadd.f32 %v1074, %v1166
    %v1168 = vpop.f32.mrb[0].mxu0
    %1169 = vmatprep.mubr.f32.mxu0 0.0
    %1170 = vmatmul.mubr.f32.gmra.mrb[0].mxu0 %v1092
    %v1171 = vpop.f32.mrb[0].mxu0
    %v1172 = vadd.f32 %v1078, %v1171
    %v1173 = vpop.f32.mrb[0].mxu0
    %1174 = vmatprep.mubr.f32.mxu0 0.0
    %1175 = vmatmul.mubr.f32.gmra.mrb[0].mxu0 %v1095
    %v1176 = vpop.f32.mrb[0].mxu0
    %v1177 = vadd.f32 %v1082, %v1176
    %v1178 = vpop.f32.mrb[0].mxu0
    %1179 = vmatprep.mubr.f32.mxu0 0.0
    %1180 = vmatmul.mubr.f32.gmra.mrb[0].mxu0 %v1098
    %v1181 = vpop.f32.mrb[0].mxu0
    %v1182 = vadd.f32 %v1086, %v1181
    %v1183 = vpop.f32.mrb[0].mxu0
    %1184 = vdwg.mxu0
    %v1185 = vmul.f32 %v1167, 0.1
    %v1186 = vmul.f32 %v1172, 0.1
    %v1187 = vmul.f32 %v1177, 0.1
    %v1188 = vmul.f32 %v1182, 0.1
    %v1189 = vmax.f32 %v1167, %v1185
    %v1190 = vmax.f32 %v1172, %v1186
    %v1191 = vmax.f32 %v1177, %v1187
    %v1192 = vmax.f32 %v1182, %v1188
    %v1193 = vsel %vm140, %v939, -inf
    %v1194 = vsel %vm140, %v940, -inf
    %v1195 = vsel %vm140, %v941, -inf
    %v1196 = vsel %vm140, %v942, -inf
    %v1197 = vmax.f32 %v1193, %v1194
    %v1198 = vmax.f32 %v1195, %v1196
    %v1199 = vmax.f32 %v1197, %v1198
    %v1200 = vrot.slane %v1199, 4
    %v1201 = vmax.f32 %v1199, %v1200
    %v1202 = vrot.slane %v1201, 2
    %v1203 = vmax.f32 %v1201, %v1202
    %v1204 = vrot.slane %v1203, 1
    %v1205 = vmax.f32 %v1203, %v1204
    %v1206 = vsub.f32 %v939, %v1205
    %v1207 = vsub.f32 %v940, %v1205
    %v1208 = vsub.f32 %v941, %v1205
    %v1209 = vsub.f32 %v942, %v1205
    %v1210 = vmul.f32 %v1206, 1.442695
    %v1211 = vpow.pop %v1210
    %v1212 = vmul.f32 %v1207, 1.442695
    %v1213 = vpow.pop %v1212
    %v1214 = vmul.f32 %v1208, 1.442695
    %v1215 = vpow.pop %v1214
    %v1216 = vmul.f32 %v1209, 1.442695
    %v1217 = vpow.pop %v1216
    %v1218 = vadd.f32 %v102, %v1189
    %v1219 = vadd.f32 %v107, %v1190
    %v1220 = vadd.f32 %v112, %v1191
    %v1221 = vadd.f32 %v117, %v1192
    %v1222 = vld [vmem:[%s1 + $0x180] sm:$0x1]
    %v1223 = vld [vmem:[%s1 + $0x188] sm:$0x1]
    %v1225 = vsel %vm140, 1.0, 0
    %1227 = vmatprep.subr.mxu0 0.0
    %1228 = vmatpush1.msra.mxu0 %v1211
    %1229 = vmatprep.subr.mxu0 0.0
    %1230 = vmatpush1.msra.mxu0 %v1213
    %1231 = vmatprep.subr.mxu0 0.0
    %1232 = vmatpush1.msra.mxu0 %v1215
    %1233 = vmatprep.subr.mxu0 0.0
    %1234 = vmatpush1.msra.mxu0 %v1217
    %1235 = vmatprep.subr.mxu0 0.0
    %1236 = vmatpush1.msra.mxu0 0.0
    %1237 = vmatprep.subr.mxu0 0.0
    %1238 = vmatpush1.msra.mxu0 0.0
    %1239 = vmatprep.subr.mxu0 0.0
    %1240 = vmatpush1.msra.mxu0 0.0
    %1241 = vmatprep.subr.mxu0 0.0
    %1242 = vmatpush1.msra.mxu0 0.0
    %1243 = vmatprep.subr.mxu0 0.0
    %1244 = vmatpush1.msra.mxu0 0.0
    %1245 = vmatprep.subr.mxu0 0.0
    %1246 = vmatpush1.msra.mxu0 0.0
    %1247 = vmatprep.subr.mxu0 0.0
    %1248 = vmatpush1.msra.mxu0 0.0
    %1249 = vmatprep.subr.mxu0 0.0
    %1250 = vmatpush1.msra.mxu0 0.0
    %1251 = vmatprep.subr.mxu0 0.0
    %1252 = vmatpush1.msra.mxu0 0.0
    %1253 = vmatprep.subr.mxu0 0.0
    %1254 = vmatpush1.msra.mxu0 0.0
    %1255 = vmatprep.subr.mxu0 0.0
    %1256 = vmatpush1.msra.mxu0 0.0
    %1257 = vmatprep.subr.mxu0 0.0
    %1258 = vmatpush1.msra.mxu0 0.0
    %1259 = vmatprep.subr.mxu0 0.0
    %1260 = vmatpush1.msra.mxu0 0.0
    %1261 = vmatprep.subr.mxu0 0.0
    %1262 = vmatpush1.msra.mxu0 0.0
    %1263 = vmatprep.subr.mxu0 0.0
    %1264 = vmatpush1.msra.mxu0 0.0
    %1265 = vmatprep.subr.mxu0 0.0
    %1266 = vmatpush1.msra.mxu0 0.0
    %1267 = vmatprep.subr.mxu0 0.0
    %1268 = vmatpush1.msra.mxu0 0.0
    %1269 = vmatprep.subr.mxu0 0.0
    %1270 = vmatpush1.msra.mxu0 0.0
    %1271 = vmatprep.subr.mxu0 0.0
    %1272 = vmatpush1.msra.mxu0 0.0
    %1273 = vmatprep.subr.mxu0 0.0
    %1274 = vmatpush1.msra.mxu0 0.0
    %1275 = vmatprep.subr.mxu0 0.0
    %1276 = vmatpush1.msra.mxu0 0.0
    %1277 = vmatprep.subr.mxu0 0.0
    %1278 = vmatpush1.msra.mxu0 0.0
    %1279 = vmatprep.subr.mxu0 0.0
    %1280 = vmatpush1.msra.mxu0 0.0
    %1281 = vmatprep.subr.mxu0 0.0
    %1282 = vmatpush1.msra.mxu0 0.0
    %1283 = vmatprep.subr.mxu0 0.0
    %1284 = vmatpush1.msra.mxu0 0.0
    %1285 = vmatprep.subr.mxu0 0.0
    %1286 = vmatpush1.msra.mxu0 0.0
    %1287 = vmatprep.subr.mxu0 0.0
    %1288 = vmatpush1.msra.mxu0 0.0
    %1289 = vmatprep.subr.mxu0 0.0
    %1290 = vmatpush1.msra.mxu0 0.0
    %1291 = vmatprep.mubr.f32.mxu0 0.0
    %1292 = vmatmul.mubr.f32.gmra.mrb[0].mxu0 %v1225
    %v1293 = vpop.f32.mrb[0].mxu0
    %v1294 = vadd.f32 0.0, %v1293
    %v1295 = vpop.f32.mrb[0].mxu0
    %1296 = vdwg.mxu0
    %v1297 = vmul.f32 %v1218, %v1211
    %v1298 = vmul.f32 %v1219, %v1213
    %v1299 = vmul.f32 %v1220, %v1215
    %v1300 = vmul.f32 %v1221, %v1217
    %v1302 = vsel %vm140, %v1222, 0
    %1304 = vmatprep.subr.mxu0 0.0
    %1305 = vmatpush1.msra.mxu0 %v1297
    %1306 = vmatprep.subr.mxu0 0.0
    %1307 = vmatpush1.msra.mxu0 %v1298
    %1308 = vmatprep.subr.mxu0 0.0
    %1309 = vmatpush1.msra.mxu0 %v1299
    %1310 = vmatprep.subr.mxu0 0.0
    %1311 = vmatpush1.msra.mxu0 %v1300
    %1312 = vmatprep.subr.mxu0 0.0
    %1313 = vmatpush1.msra.mxu0 0.0
    %1314 = vmatprep.subr.mxu0 0.0
    %1315 = vmatpush1.msra.mxu0 0.0
    %1316 = vmatprep.subr.mxu0 0.0
    %1317 = vmatpush1.msra.mxu0 0.0
    %1318 = vmatprep.subr.mxu0 0.0
    %1319 = vmatpush1.msra.mxu0 0.0
    %1320 = vmatprep.subr.mxu0 0.0
    %1321 = vmatpush1.msra.mxu0 0.0
    %1322 = vmatprep.subr.mxu0 0.0
    %1323 = vmatpush1.msra.mxu0 0.0
    %1324 = vmatprep.subr.mxu0 0.0
    %1325 = vmatpush1.msra.mxu0 0.0
    %1326 = vmatprep.subr.mxu0 0.0
    %1327 = vmatpush1.msra.mxu0 0.0
    %1328 = vmatprep.subr.mxu0 0.0
    %1329 = vmatpush1.msra.mxu0 0.0
    %1330 = vmatprep.subr.mxu0 0.0
    %1331 = vmatpush1.msra.mxu0 0.0
    %1332 = vmatprep.subr.mxu0 0.0
    %1333 = vmatpush1.msra.mxu0 0.0
    %1334 = vmatprep.subr.mxu0 0.0
    %1335 = vmatpush1.msra.mxu0 0.0
    %1336 = vmatprep.subr.mxu0 0.0
    %1337 = vmatpush1.msra.mxu0 0.0
    %1338 = vmatprep.subr.mxu0 0.0
    %1339 = vmatpush1.msra.mxu0 0.0
    %1340 = vmatprep.subr.mxu0 0.0
    %1341 = vmatpush1.msra.mxu0 0.0
    %1342 = vmatprep.subr.mxu0 0.0
    %1343 = vmatpush1.msra.mxu0 0.0
    %1344 = vmatprep.subr.mxu0 0.0
    %1345 = vmatpush1.msra.mxu0 0.0
    %1346 = vmatprep.subr.mxu0 0.0
    %1347 = vmatpush1.msra.mxu0 0.0
    %1348 = vmatprep.subr.mxu0 0.0
    %1349 = vmatpush1.msra.mxu0 0.0
    %1350 = vmatprep.subr.mxu0 0.0
    %1351 = vmatpush1.msra.mxu0 0.0
    %1352 = vmatprep.subr.mxu0 0.0
    %1353 = vmatpush1.msra.mxu0 0.0
    %1354 = vmatprep.subr.mxu0 0.0
    %1355 = vmatpush1.msra.mxu0 0.0
    %1356 = vmatprep.subr.mxu0 0.0
    %1357 = vmatpush1.msra.mxu0 0.0
    %1358 = vmatprep.subr.mxu0 0.0
    %1359 = vmatpush1.msra.mxu0 0.0
    %1360 = vmatprep.subr.mxu0 0.0
    %1361 = vmatpush1.msra.mxu0 0.0
    %1362 = vmatprep.subr.mxu0 0.0
    %1363 = vmatpush1.msra.mxu0 0.0
    %1364 = vmatprep.subr.mxu0 0.0
    %1365 = vmatpush1.msra.mxu0 0.0
    %1366 = vmatprep.subr.mxu0 0.0
    %1367 = vmatpush1.msra.mxu0 0.0
    %1368 = vmatprep.mubr.f32.mxu0 0.0
    %1369 = vmatmul.mubr.f32.gmra.mrb[0].mxu0 %v1302
    %v1370 = vpop.f32.mrb[0].mxu0
    %v1371 = vadd.f32 0.0, %v1370
    %v1372 = vpop.f32.mrb[0].mxu0
    %1373 = vdwg.mxu0
    %v1375 = vsel %vm140, %v1223, 0
    %1377 = vmatprep.subr.mxu0 0.0
    %1378 = vmatpush1.msra.mxu0 %v1218
    %1379 = vmatprep.subr.mxu0 0.0
    %1380 = vmatpush1.msra.mxu0 %v1219
    %1381 = vmatprep.subr.mxu0 0.0
    %1382 = vmatpush1.msra.mxu0 %v1220
    %1383 = vmatprep.subr.mxu0 0.0
    %1384 = vmatpush1.msra.mxu0 %v1221
    %1385 = vmatprep.subr.mxu0 0.0
    %1386 = vmatpush1.msra.mxu0 0.0
    %1387 = vmatprep.subr.mxu0 0.0
    %1388 = vmatpush1.msra.mxu0 0.0
    %1389 = vmatprep.subr.mxu0 0.0
    %1390 = vmatpush1.msra.mxu0 0.0
    %1391 = vmatprep.subr.mxu0 0.0
    %1392 = vmatpush1.msra.mxu0 0.0
    %1393 = vmatprep.subr.mxu0 0.0
    %1394 = vmatpush1.msra.mxu0 0.0
    %1395 = vmatprep.subr.mxu0 0.0
    %1396 = vmatpush1.msra.mxu0 0.0
    %1397 = vmatprep.subr.mxu0 0.0
    %1398 = vmatpush1.msra.mxu0 0.0
    %1399 = vmatprep.subr.mxu0 0.0
    %1400 = vmatpush1.msra.mxu0 0.0
    %1401 = vmatprep.subr.mxu0 0.0
    %1402 = vmatpush1.msra.mxu0 0.0
    %1403 = vmatprep.subr.mxu0 0.0
    %1404 = vmatpush1.msra.mxu0 0.0
    %1405 = vmatprep.subr.mxu0 0.0
    %1406 = vmatpush1.msra.mxu0 0.0
    %1407 = vmatprep.subr.mxu0 0.0
    %1408 = vmatpush1.msra.mxu0 0.0
    %1409 = vmatprep.subr.mxu0 0.0
    %1410 = vmatpush1.msra.mxu0 0.0
    %1411 = vmatprep.subr.mxu0 0.0
    %1412 = vmatpush1.msra.mxu0 0.0
    %1413 = vmatprep.subr.mxu0 0.0
    %1414 = vmatpush1.msra.mxu0 0.0
    %1415 = vmatprep.subr.mxu0 0.0
    %1416 = vmatpush1.msra.mxu0 0.0
    %1417 = vmatprep.subr.mxu0 0.0
    %1418 = vmatpush1.msra.mxu0 0.0
    %1419 = vmatprep.subr.mxu0 0.0
    %1420 = vmatpush1.msra.mxu0 0.0
    %1421 = vmatprep.subr.mxu0 0.0
    %1422 = vmatpush1.msra.mxu0 0.0
    %1423 = vmatprep.subr.mxu0 0.0
    %1424 = vmatpush1.msra.mxu0 0.0
    %1425 = vmatprep.subr.mxu0 0.0
    %1426 = vmatpush1.msra.mxu0 0.0
    %1427 = vmatprep.subr.mxu0 0.0
    %1428 = vmatpush1.msra.mxu0 0.0
    %1429 = vmatprep.subr.mxu0 0.0
    %1430 = vmatpush1.msra.mxu0 0.0
    %1431 = vmatprep.subr.mxu0 0.0
    %1432 = vmatpush1.msra.mxu0 0.0
    %1433 = vmatprep.subr.mxu0 0.0
    %1434 = vmatpush1.msra.mxu0 0.0
    %1435 = vmatprep.subr.mxu0 0.0
    %1436 = vmatpush1.msra.mxu0 0.0
    %1437 = vmatprep.subr.mxu0 0.0
    %1438 = vmatpush1.msra.mxu0 0.0
    %1439 = vmatprep.subr.mxu0 0.0
    %1440 = vmatpush1.msra.mxu0 0.0
    %1441 = vmatprep.mubr.f32.mxu0 0.0
    %1442 = vmatmul.mubr.f32.gmra.mrb[0].mxu0 %v1375
    %v1443 = vpop.f32.mrb[0].mxu0
    %v1444 = vadd.f32 0.0, %v1443
    %v1445 = vpop.f32.mrb[0].mxu0
    %1446 = vdwg.mxu0
    %v1447 = vrcp.pop %v1294
    %v1448 = vmul.f32 %v1371, %v1447
    %v1449 = vld [vmem:[%s1 + $0x190] sm:$0xff]
    %v1450 = vld [vmem:[%s1 + $0x198] sm:$0xff]
    %v1451 = vld [vmem:[%s1 + $0x1a0] sm:$0xff]
    %v1452 = vld [vmem:[%s1 + $0x1a8] sm:$0xff]
    %v1453 = vld [vmem:[%s1 + $0x1b0] sm:$0xff]
    %v1454 = vld [vmem:[%s1 + $0x1b8] sm:$0xff]
    %v1455 = vld [vmem:[%s1 + $0x1c0] sm:$0xff]
    %v1456 = vld [vmem:[%s1 + $0x1c8] sm:$0xff]
    %v1458 = vsel %vm140, %v1448, 0
    %1460 = vmatprep.subr.mxu0 0.0
    %1461 = vmatpush1.msra.mxu0 %v1449
    %1462 = vmatprep.subr.mxu0 0.0
    %1463 = vmatpush1.msra.mxu0 %v1450
    %1464 = vmatprep.subr.mxu0 0.0
    %1465 = vmatpush1.msra.mxu0 %v1451
    %1466 = vmatprep.subr.mxu0 0.0
    %1467 = vmatpush1.msra.mxu0 %v1452
    %1468 = vmatprep.subr.mxu0 0.0
    %1469 = vmatpush1.msra.mxu0 0.0
    %1470 = vmatprep.subr.mxu0 0.0
    %1471 = vmatpush1.msra.mxu0 0.0
    %1472 = vmatprep.subr.mxu0 0.0
    %1473 = vmatpush1.msra.mxu0 0.0
    %1474 = vmatprep.subr.mxu0 0.0
    %1475 = vmatpush1.msra.mxu0 0.0
    %1476 = vmatprep.subr.mxu0 0.0
    %1477 = vmatpush1.msra.mxu0 0.0
    %1478 = vmatprep.subr.mxu0 0.0
    %1479 = vmatpush1.msra.mxu0 0.0
    %1480 = vmatprep.subr.mxu0 0.0
    %1481 = vmatpush1.msra.mxu0 0.0
    %1482 = vmatprep.subr.mxu0 0.0
    %1483 = vmatpush1.msra.mxu0 0.0
    %1484 = vmatprep.subr.mxu0 0.0
    %1485 = vmatpush1.msra.mxu0 0.0
    %1486 = vmatprep.subr.mxu0 0.0
    %1487 = vmatpush1.msra.mxu0 0.0
    %1488 = vmatprep.subr.mxu0 0.0
    %1489 = vmatpush1.msra.mxu0 0.0
    %1490 = vmatprep.subr.mxu0 0.0
    %1491 = vmatpush1.msra.mxu0 0.0
    %1492 = vmatprep.subr.mxu0 0.0
    %1493 = vmatpush1.msra.mxu0 0.0
    %1494 = vmatprep.subr.mxu0 0.0
    %1495 = vmatpush1.msra.mxu0 0.0
    %1496 = vmatprep.subr.mxu0 0.0
    %1497 = vmatpush1.msra.mxu0 0.0
    %1498 = vmatprep.subr.mxu0 0.0
    %1499 = vmatpush1.msra.mxu0 0.0
    %1500 = vmatprep.subr.mxu0 0.0
    %1501 = vmatpush1.msra.mxu0 0.0
    %1502 = vmatprep.subr.mxu0 0.0
    %1503 = vmatpush1.msra.mxu0 0.0
    %1504 = vmatprep.subr.mxu0 0.0
    %1505 = vmatpush1.msra.mxu0 0.0
    %1506 = vmatprep.subr.mxu0 0.0
    %1507 = vmatpush1.msra.mxu0 0.0
    %1508 = vmatprep.subr.mxu0 0.0
    %1509 = vmatpush1.msra.mxu0 0.0
    %1510 = vmatprep.subr.mxu0 0.0
    %1511 = vmatpush1.msra.mxu0 0.0
    %1512 = vmatprep.subr.mxu0 0.0
    %1513 = vmatpush1.msra.mxu0 0.0
    %1514 = vmatprep.subr.mxu0 0.0
    %1515 = vmatpush1.msra.mxu0 0.0
    %1516 = vmatprep.subr.mxu0 0.0
    %1517 = vmatpush1.msra.mxu0 0.0
    %1518 = vmatprep.subr.mxu0 0.0
    %1519 = vmatpush1.msra.mxu0 0.0
    %1520 = vmatprep.subr.mxu0 0.0
    %1521 = vmatpush1.msra.mxu0 0.0
    %1522 = vmatprep.subr.mxu0 0.0
    %1523 = vmatpush1.msra.mxu0 0.0
    %1524 = vmatprep.mubr.f32.mxu0 0.0
    %1525 = vmatmul.mubr.f32.gmra.mrb[0].mxu0 %v1458
    %v1526 = vpop.f32.mrb[0].mxu0
    %v1527 = vadd.f32 0.0, %v1526
    %v1528 = vpop.f32.mrb[0].mxu0
    %1529 = vdwg.mxu0
    %v1531 = vsel %vm140, %v1444, 0
    %1533 = vmatprep.subr.mxu0 0.0
    %1534 = vmatpush1.msra.mxu0 %v1453
    %1535 = vmatprep.subr.mxu0 0.0
    %1536 = vmatpush1.msra.mxu0 %v1454
    %1537 = vmatprep.subr.mxu0 0.0
    %1538 = vmatpush1.msra.mxu0 %v1455
    %1539 = vmatprep.subr.mxu0 0.0
    %1540 = vmatpush1.msra.mxu0 %v1456
    %1541 = vmatprep.subr.mxu0 0.0
    %1542 = vmatpush1.msra.mxu0 0.0
    %1543 = vmatprep.subr.mxu0 0.0
    %1544 = vmatpush1.msra.mxu0 0.0
    %1545 = vmatprep.subr.mxu0 0.0
    %1546 = vmatpush1.msra.mxu0 0.0
    %1547 = vmatprep.subr.mxu0 0.0
    %1548 = vmatpush1.msra.mxu0 0.0
    %1549 = vmatprep.subr.mxu0 0.0
    %1550 = vmatpush1.msra.mxu0 0.0
    %1551 = vmatprep.subr.mxu0 0.0
    %1552 = vmatpush1.msra.mxu0 0.0
    %1553 = vmatprep.subr.mxu0 0.0
    %1554 = vmatpush1.msra.mxu0 0.0
    %1555 = vmatprep.subr.mxu0 0.0
    %1556 = vmatpush1.msra.mxu0 0.0
    %1557 = vmatprep.subr.mxu0 0.0
    %1558 = vmatpush1.msra.mxu0 0.0
    %1559 = vmatprep.subr.mxu0 0.0
    %1560 = vmatpush1.msra.mxu0 0.0
    %1561 = vmatprep.subr.mxu0 0.0
    %1562 = vmatpush1.msra.mxu0 0.0
    %1563 = vmatprep.subr.mxu0 0.0
    %1564 = vmatpush1.msra.mxu0 0.0
    %1565 = vmatprep.subr.mxu0 0.0
    %1566 = vmatpush1.msra.mxu0 0.0
    %1567 = vmatprep.subr.mxu0 0.0
    %1568 = vmatpush1.msra.mxu0 0.0
    %1569 = vmatprep.subr.mxu0 0.0
    %1570 = vmatpush1.msra.mxu0 0.0
    %1571 = vmatprep.subr.mxu0 0.0
    %1572 = vmatpush1.msra.mxu0 0.0
    %1573 = vmatprep.subr.mxu0 0.0
    %1574 = vmatpush1.msra.mxu0 0.0
    %1575 = vmatprep.subr.mxu0 0.0
    %1576 = vmatpush1.msra.mxu0 0.0
    %1577 = vmatprep.subr.mxu0 0.0
    %1578 = vmatpush1.msra.mxu0 0.0
    %1579 = vmatprep.subr.mxu0 0.0
    %1580 = vmatpush1.msra.mxu0 0.0
    %1581 = vmatprep.subr.mxu0 0.0
    %1582 = vmatpush1.msra.mxu0 0.0
    %1583 = vmatprep.subr.mxu0 0.0
    %1584 = vmatpush1.msra.mxu0 0.0
    %1585 = vmatprep.subr.mxu0 0.0
    %1586 = vmatpush1.msra.mxu0 0.0
    %1587 = vmatprep.subr.mxu0 0.0
    %1588 = vmatpush1.msra.mxu0 0.0
    %1589 = vmatprep.subr.mxu0 0.0
    %1590 = vmatpush1.msra.mxu0 0.0
    %1591 = vmatprep.subr.mxu0 0.0
    %1592 = vmatpush1.msra.mxu0 0.0
    %1593 = vmatprep.subr.mxu0 0.0
    %1594 = vmatpush1.msra.mxu0 0.0
    %1595 = vmatprep.subr.mxu0 0.0
    %1596 = vmatpush1.msra.mxu0 0.0
    %1597 = vmatprep.mubr.f32.mxu0 0.0
    %1598 = vmatmul.mubr.f32.gmra.mrb[0].mxu0 %v1531
    %v1599 = vpop.f32.mrb[0].mxu0
    %v1600 = vadd.f32 0.0, %v1599
    %v1601 = vpop.f32.mrb[0].mxu0
    %1602 = vdwg.mxu0
    %v1604 = vrot.slane %v1600, 7
    %v1606 = vsel %vm31, %v1527, %v1604
    %v1607 = vld [vmem:[%s1 + $0x1d0] sm:$0x3]
    %v1608 = vadd.f32 %v1606, %v1607
    %vm1609 = vcmask 123904
    %1610 = vst.msk [vmem:[#allocation2] sm:$0x3] %vm1609, %v1608
    // Predicated region
    $region10: #{tpu_custom_call.1} parent=1 // pred_check
      _
    $region11: #{tpu_custom_call.1} parent=1 // pred_check_branch
      %1612 = sbr.rel (0) target = $region13
    $region12: #{tpu_custom_call.1} parent=1 // pred_region
      %s1614 = ssub.s32 32, 32
      %1615 = vsyncadd [#allocation3], %s1614
      %s1617 = sshll.u32 [#allocation2], 4
      %s1618 = int_to_ptr.vmem [resolvable:$true] %s1617
      %1620 = dma.vmem_to_hbm [thread:$0]  %s1618, 32, %s2, [#allocation3]
    $region13: #{tpu_custom_call.1} parent=1 // pred_fallthru
      _
    // Predicated region
    $region14: #{tpu_custom_call.1} parent=1 // pred_check
      _
    $region15: #{tpu_custom_call.1} parent=1 // pred_check_branch
      %1622 = sbr.rel (0) target = $region17
    $region16: #{tpu_custom_call.1} parent=1 // pred_region
      %1623 = dma.done [#allocation3], 32
    $region17: #{tpu_custom_call.1} parent=1 // pred_fallthru
      _
    %1624 = vsyncpa [#allocation3], 1

</llo_original>
